<compile_context>
chip_gen: v7x
topology: tpu7x:2x2x1
jax: 0.10.0
libtpu: 0.0.40
codegen_flags: <defaults>
</compile_context>

<pallas_src>
import jax
import jax.numpy as jnp
from jax.experimental import pallas as pl
from jax.experimental.pallas import tpu as pltpu


def _make_kernel(norm_att: bool, tn: int, C: int, P: int):
    inv_p = float(1.0 / P)

    def kernel(loc_ref, gl_ref, w_ref, cf_ref, g_ref):
        # loc_ref: (TN, C, P)  gl_ref: (TN, C, Pg), Pg in {1, P}
        # w_ref  : (1, C)      cf_ref: (TN, 1, P)   g_ref: (TN, 1, C)
        loc = loc_ref[...]
        x = loc + gl_ref[...]                       # lane-broadcast add (VPU)

        # 1x1 conv (out_ch=1, no bias): contract C on the MXU.
        w = jnp.broadcast_to(w_ref[...].reshape(1, 1, C), (tn, 1, C))
        cf = jnp.einsum(
            "nqc,ncp->nqp", w, x,
            preferred_element_type=jnp.float32,
            precision=jax.lax.Precision.HIGHEST)    # (TN, 1, P)
        cf_ref[...] = cf.astype(cf_ref.dtype)

        if norm_att:
            # softmax over the flattened spatial dim (lanes).
            m = jnp.max(cf, axis=-1, keepdims=True)
            e = jnp.exp(cf - m)
            denom = jnp.sum(e, axis=-1, keepdims=True)
            att = e * pl.reciprocal(denom, approx=True)   # EUP, not VPU div
        else:
            att = jax.nn.sigmoid(cf)

        # g[n, c] = sum_p att[n, p] * loc[n, c, p]: contract P (lanes) on the
        # MXU; result is already lane-dense in C.
        g = jnp.einsum(
            "nqp,ncp->nqc", att.astype(loc.dtype), loc,
            preferred_element_type=jnp.float32,
            precision=jax.lax.Precision.HIGHEST)    # (TN, 1, C)
        if not norm_att:
            g = g * inv_p                           # adaptive_avg_pool2d -> mean
        g_ref[...] = g.astype(g_ref.dtype)

    return kernel


def _pick_batch_tile(N: int, C: int, P: int, itemsize: int) -> int:
    """Pack batch elements per grid step when C under-fills the 8 sublanes,
    while keeping the loc block comfortably inside scoped VMEM."""
    want = max(1, 8 // max(C, 1))
    vmem_budget = (4 << 20) // max(1, C * P * itemsize)   # ~4 MiB loc block
    want = max(1, min(want, vmem_budget, N))
    tn = 1
    for d in range(1, want + 1):
        if N % d == 0:
            tn = d
    return tn


def linear_att_block(loc, gl, weight, norm_att=True):
    """loc: (N, C, W, H).  gl: broadcastable to loc, e.g. (N, C, 1, 1) global
    descriptor or (N, C, W, H).  weight: Conv2d(C, 1, k=1, bias=False) weight
    of shape (1, C, 1, 1).  Returns (cf (N,1,W,H), g (N,C)) matching PyTorch."""
    N, C, W, H = loc.shape
    P = W * H
    dtype = loc.dtype

    loc_r = loc.reshape(N, C, P)

    # Keep gl at native spatial footprint: do NOT materialize an (N,C,P)
    # broadcast in HBM when gl is a global (1x1) descriptor.
    gl = jnp.asarray(gl, dtype)
    if gl.shape[-2:] == (1, 1):
        gl_r = jnp.broadcast_to(gl, (N, C, 1, 1)).reshape(N, C, 1)
    else:
        gl_r = jnp.broadcast_to(gl, loc.shape).reshape(N, C, P)  # no-op if same shape
    Pg = gl_r.shape[-1]

    w = weight.reshape(1, C).astype(dtype)

    tn = _pick_batch_tile(N, C, P, jnp.dtype(dtype).itemsize)

    cf_out, g_out = pl.pallas_call(
        _make_kernel(norm_att, tn, C, P),
        out_shape=(
            jax.ShapeDtypeStruct((N, 1, P), dtype),   # cf, lane-dense in P
            jax.ShapeDtypeStruct((N, 1, C), dtype),   # g, lane-dense in C
        ),
        grid_spec=pltpu.PrefetchScalarGridSpec(
            num_scalar_prefetch=0,
            grid=(N // tn,),
            in_specs=[
                pl.BlockSpec((tn, C, P), lambda n: (n, 0, 0)),
                pl.BlockSpec((tn, C, Pg), lambda n: (n, 0, 0)),
                pl.BlockSpec((1, C), lambda n: (0, 0)),
            ],
            out_specs=[
                pl.BlockSpec((tn, 1, P), lambda n: (n, 0, 0)),
                pl.BlockSpec((tn, 1, C), lambda n: (n, 0, 0)),
            ],
        ),
        compiler_params=pltpu.CompilerParams(dimension_semantics=("parallel",)),
    )(loc_r, gl_r, w)

    return cf_out.reshape(N, 1, W, H), g_out.reshape(N, C)


def _reference(loc, gl, weight, norm_att=True):
    # Pure-JAX reference mirroring the PyTorch forward (exact f32 reductions).
    N, C, W, H = loc.shape
    x = loc + gl
    w = weight.reshape(C)
    cf = jnp.sum(x * w[None, :, None, None], axis=1, keepdims=True)  # (N,1,W,H)
    if norm_att:
        att = jax.nn.softmax(cf.reshape(N, 1, -1), axis=2).reshape(N, 1, W, H)
        g = (att * loc).reshape(N, C, -1).sum(axis=2)
    else:
        att = jax.nn.sigmoid(cf)
        g = (att * loc).mean(axis=(2, 3))
    return cf, g


if __name__ == "__main__":
    N, C, W, H = 2, 4, 16, 16
    key = jax.random.PRNGKey(0)
    k1, k2, k3, k4 = jax.random.split(key, 4)

    loc = jax.random.normal(k1, (N, C, W, H), dtype=jnp.float32)
    gl_full = jax.random.normal(k2, (N, C, W, H), dtype=jnp.float32)
    gl_global = jax.random.normal(k4, (N, C, 1, 1), dtype=jnp.float32)
    # Conv2d(in_ch=C, out_ch=1, k=1, bias=False) weight: (1, C, 1, 1)
    bound = 1.0 / (C ** 0.5)
    weight = jax.random.uniform(k3, (1, C, 1, 1), dtype=jnp.float32,
                                minval=-bound, maxval=bound)

    ok = True
    for gl in (gl_full, gl_global):
        for norm_att in (True, False):
            cf, g = linear_att_block(loc, gl, weight, norm_att=norm_att)
            jax.block_until_ready((cf, g))
            cf_ref, g_ref = _reference(loc, gl, weight, norm_att=norm_att)
            ok &= bool(jnp.allclose(cf, cf_ref, atol=2e-3, rtol=2e-3))
            ok &= bool(jnp.allclose(g, g_ref, atol=2e-3, rtol=2e-3))

    if ok:
        print("KERNEL_OK")
    else:
        print("KERNEL_MISMATCH")
</pallas_src>

<mosaic_0001>
module attributes {stable_mosaic.version = 11 : i64} {
  func.func @kernel(%arg0: i32, %arg1: memref<2x4x256xf32, #tpu.memory_space<vmem>>, %arg2: memref<2x4x256xf32, #tpu.memory_space<vmem>>, %arg3: memref<1x4xf32, #tpu.memory_space<vmem>>, %arg4: memref<2x1x256xf32, #tpu.memory_space<vmem>>, %arg5: memref<2x1x4xf32, #tpu.memory_space<vmem>>) attributes {dimension_semantics = [#tpu.dimension_semantics<parallel>], iteration_bounds = array<i64: 1>, scalar_prefetch = 0 : i64, scratch_operands = 0 : i64, tpu.core_type = #tpu.core_type<tc>, window_params = [{transform_indices = @transform_0, window_bounds = array<i64: 2, 4, 256>}, {transform_indices = @transform_1, window_bounds = array<i64: 2, 4, 256>}, {pipeline_mode = #tpu.pipeline_mode<synchronous>, transform_indices = @transform_2, window_bounds = array<i64: 1, 4>}, {transform_indices = @transform_3, window_bounds = array<i64: 2, 1, 256>}, {transform_indices = @transform_4, window_bounds = array<i64: 2, 1, 4>}]} {
    %c0 = arith.constant 0 : index
    %c0_0 = arith.constant 0 : index
    %c0_1 = arith.constant 0 : index
    %0 = vector.load %arg1[%c0, %c0_0, %c0_1] : memref<2x4x256xf32, #tpu.memory_space<vmem>>, vector<2x4x256xf32>
    %c0_2 = arith.constant 0 : index
    %c0_3 = arith.constant 0 : index
    %c0_4 = arith.constant 0 : index
    %1 = vector.load %arg2[%c0_2, %c0_3, %c0_4] : memref<2x4x256xf32, #tpu.memory_space<vmem>>, vector<2x4x256xf32>
    %2 = arith.addf %0, %1 : vector<2x4x256xf32>
    %c0_5 = arith.constant 0 : index
    %c0_6 = arith.constant 0 : index
    %3 = vector.load %arg3[%c0_5, %c0_6] : memref<1x4xf32, #tpu.memory_space<vmem>>, vector<1x4xf32>
    %4 = vector.shape_cast %3 : vector<1x4xf32> to vector<1x1x4xf32>
    %5 = vector.shape_cast %4 : vector<1x1x4xf32> to vector<1x1x4xf32>
    %6 = vector.broadcast %5 : vector<1x1x4xf32> to vector<2x1x4xf32>
    "tpu.trace_start"() <{level = 10 : i32, message = "nqc,ncp->nqp"}> : () -> ()
    %cst = arith.constant dense<0.000000e+00> : vector<2x1x256xf32>
    %7 = tpu.matmul %6, %2, %cst {dimension_numbers = #tpu.dot_dimension_numbers<[2], [1], [1], [2], [0, 0, 0, 1, 1, 2], [0], [0]>, precision = #tpu.contract_precision<fp32>} : vector<2x1x4xf32>, vector<2x4x256xf32>, vector<2x1x256xf32> -> vector<2x1x256xf32>
    "tpu.trace_stop"() : () -> ()
    %c0_7 = arith.constant 0 : index
    %c0_8 = arith.constant 0 : index
    %c0_9 = arith.constant 0 : index
    %8 = vector.load %arg4[%c0_7, %c0_8, %c0_9] : memref<2x1x256xf32, #tpu.memory_space<vmem>>, vector<2x1x256xf32>
    tpu.vector_store %arg4[%c0_7, %c0_8, %c0_9], %7 {strides = array<i32>} : memref<2x1x256xf32, #tpu.memory_space<vmem>>, vector<2x1x256xf32>,
    %cst_10 = arith.constant dense<0xFF800000> : vector<2x1xf32>
    %9 = vector.multi_reduction <maximumf>, %7, %cst_10 [2] : vector<2x1x256xf32> to vector<2x1xf32>
    %10 = vector.shape_cast %9 : vector<2x1xf32> to vector<2x1x1xf32>
    %11 = vector.broadcast %10 : vector<2x1x1xf32> to vector<2x1x256xf32>
    %12 = arith.subf %7, %11 : vector<2x1x256xf32>
    %13 = math.exp %12 : vector<2x1x256xf32>
    %cst_11 = arith.constant dense<0.000000e+00> : vector<2x1xf32>
    %14 = vector.multi_reduction <add>, %13, %cst_11 [2] : vector<2x1x256xf32> to vector<2x1xf32>
    %15 = vector.shape_cast %14 : vector<2x1xf32> to vector<2x1x1xf32>
    %16 = tpu.reciprocal %15 {approx = true} : vector<2x1x1xf32> -> vector<2x1x1xf32>
    %17 = vector.broadcast %16 : vector<2x1x1xf32> to vector<2x1x256xf32>
    %18 = arith.mulf %13, %17 : vector<2x1x256xf32>
    "tpu.trace_start"() <{level = 10 : i32, message = "nqp,ncp->nqc"}> : () -> ()
    %cst_12 = arith.constant dense<0.000000e+00> : vector<2x1x4xf32>
    %19 = tpu.matmul %18, %0, %cst_12 {dimension_numbers = #tpu.dot_dimension_numbers<[2], [2], [1], [1], [0, 0, 0, 1, 1, 1], [0], [0]>, precision = #tpu.contract_precision<fp32>} : vector<2x1x256xf32>, vector<2x4x256xf32>, vector<2x1x4xf32> -> vector<2x1x4xf32>
    "tpu.trace_stop"() : () -> ()
    %c0_13 = arith.constant 0 : index
    %c0_14 = arith.constant 0 : index
    %c0_15 = arith.constant 0 : index
    %20 = vector.load %arg5[%c0_13, %c0_14, %c0_15] : memref<2x1x4xf32, #tpu.memory_space<vmem>>, vector<2x1x4xf32>
    tpu.vector_store %arg5[%c0_13, %c0_14, %c0_15], %19 {strides = array<i32>} : memref<2x1x4xf32, #tpu.memory_space<vmem>>, vector<2x1x4xf32>,
    return
  }
  func.func @transform_0(%arg0: i32) -> (i32, i32, i32) {
    %c0_i32 = arith.constant 0 : i32
    %c0_i32_0 = arith.constant 0 : i32
    %c0_i32_1 = arith.constant 0 : i32
    return %arg0, %c0_i32, %c0_i32_0 : i32, i32, i32
  }
  func.func @transform_1(%arg0: i32) -> (i32, i32, i32) {
    %c0_i32 = arith.constant 0 : i32
    %c0_i32_0 = arith.constant 0 : i32
    %c0_i32_1 = arith.constant 0 : i32
    return %arg0, %c0_i32, %c0_i32_0 : i32, i32, i32
  }
  func.func @transform_2(%arg0: i32) -> (i32, i32) {
    %c0_i32 = arith.constant 0 : i32
    %c0_i32_0 = arith.constant 0 : i32
    %c0_i32_1 = arith.constant 0 : i32
    return %c0_i32, %c0_i32_0 : i32, i32
  }
  func.func @transform_3(%arg0: i32) -> (i32, i32, i32) {
    %c0_i32 = arith.constant 0 : i32
    %c0_i32_0 = arith.constant 0 : i32
    %c0_i32_1 = arith.constant 0 : i32
    return %arg0, %c0_i32, %c0_i32_0 : i32, i32, i32
  }
  func.func @transform_4(%arg0: i32) -> (i32, i32, i32) {
    %c0_i32 = arith.constant 0 : i32
    %c0_i32_0 = arith.constant 0 : i32
    %c0_i32_1 = arith.constant 0 : i32
    return %arg0, %c0_i32, %c0_i32_0 : i32, i32, i32
  }
}

</mosaic_0001>

<llo_original>
// kernel: tpu_custom_call.1
$region0: #{tpu_custom_call.1}
  #allocation0 [shape = 'u32[]', space=smem, size = 0x4, offset = 0x4, fixed_abs, tag = 'smem constant byte address 0x4 - core index']
  #allocation1 [shape = 'u32[144,128]{1,0:T(1,128)}', space=vmem, size = 0x12000, scoped, tag = 'internal scratch']
  %s0 = inlined_call_operand.hbm [shape: f32[2,4,256], index: 0, kind: input, shape index: {}]
  %s1 = inlined_call_operand.hbm [shape: f32[2,4,256], index: 1, kind: input, shape index: {}]
  %s2 = inlined_call_operand.vmem [shape: f32[1,4], index: 2, kind: input, shape index: {}]
  %s3 = inlined_call_operand.hbm [shape: f32[2,1,256], index: 3, kind: output, shape index: {0}]
  %s4 = inlined_call_operand.hbm [shape: f32[2,1,4], index: 4, kind: output, shape index: {1}]
  %5 = xla_tuple %s3, %s4
  %s6 = sld [smem:[#allocation0]]
  $region38: #{tpu_custom_call.1} parent=0
    _
  %s8 = ssub.s32 1, %s6
  %s9 = scalar_select 0, %s8, %s6
  $region1: #{tpu_custom_call.1} parent=0
    #allocation2 [shape = 'u8[8192]{0}', space=vmem, size = 0x2000, scoped, tag = 'input window, operand 0, single buffered']
    #allocation3 [shape = 's32[1]{0}', space=sflag, size = 0x4, scoped, tag = 'scoped memory for tpu_custom_call.1']
    #allocation4 [shape = 's32[1]{0}', space=sflag, size = 0x4, scoped, tag = 'scoped memory for tpu_custom_call.1']
    #allocation5 [shape = 'u8[8192]{0}', space=vmem, size = 0x2000, scoped, tag = 'input window, operand 1, single buffered']
    #allocation6 [shape = 's32[1]{0}', space=sflag, size = 0x4, scoped, tag = 'scoped memory for tpu_custom_call.1']
    #allocation7 [shape = 'u8[2048]{0}', space=vmem, size = 0x800, scoped, tag = 'output window, operand 0, single buffered']
    #allocation8 [shape = 'u8[1024]{0}', space=vmem, size = 0x400, scoped, tag = 'output window, operand 1, single buffered']
    #allocation9 [shape = 's32[1]{0}', space=sflag, size = 0x4, scoped, tag = 'scoped memory for tpu_custom_call.1']
    %10 = vsyncpa [#allocation3], 0
    %11 = vsyncpa [#allocation6], 0
    %12 = vsyncpa [#allocation4], 0
    %13 = vsyncpa [#allocation9], 0
    // Predicated region
    $region2: #{tpu_custom_call.1} parent=1 // pred_check
      _
    $region3: #{tpu_custom_call.1} parent=1 // pred_check_branch
      %15 = sbr.rel (0) target = $region5
    $region4: #{tpu_custom_call.1} parent=1 // pred_region
      %s17 = ssub.s32 256, 256
      %18 = vsyncadd [#allocation3], %s17
      %s19 = sshll.u32 [#allocation2], 4
      %s20 = int_to_ptr.vmem [resolvable:$true] %s19
      %25 = dma.hbm_to_vmem [thread:$0]  %s0, 256, %s20, [#allocation3], 128, 128, 8
    $region5: #{tpu_custom_call.1} parent=1 // pred_fallthru
      _
    // Predicated region
    $region6: #{tpu_custom_call.1} parent=1 // pred_check
      _
    $region7: #{tpu_custom_call.1} parent=1 // pred_check_branch
      %27 = sbr.rel (0) target = $region9
    $region8: #{tpu_custom_call.1} parent=1 // pred_region
      %s29 = ssub.s32 256, 256
      %30 = vsyncadd [#allocation6], %s29
      %s31 = sshll.u32 [#allocation5], 4
      %s32 = int_to_ptr.vmem [resolvable:$true] %s31
      %37 = dma.hbm_to_vmem [thread:$0]  %s1, 256, %s32, [#allocation6], 128, 128, 8
    $region9: #{tpu_custom_call.1} parent=1 // pred_fallthru
      _
    // Predicated region
    $region10: #{tpu_custom_call.1} parent=1 // pred_check
      _
    $region11: #{tpu_custom_call.1} parent=1 // pred_check_branch
      %39 = sbr.rel (0) target = $region13
    $region12: #{tpu_custom_call.1} parent=1 // pred_region
      _
    $region13: #{tpu_custom_call.1} parent=1 // pred_fallthru
      _
    // Predicated region
    $region14: #{tpu_custom_call.1} parent=1 // pred_check
      _
    $region15: #{tpu_custom_call.1} parent=1 // pred_check_branch
      %41 = sbr.rel (0) target = $region17
    $region16: #{tpu_custom_call.1} parent=1 // pred_region
      %42 = dma.done [#allocation3], 256
    $region17: #{tpu_custom_call.1} parent=1 // pred_fallthru
      _
    // Predicated region
    $region18: #{tpu_custom_call.1} parent=1 // pred_check
      _
    $region19: #{tpu_custom_call.1} parent=1 // pred_check_branch
      %44 = sbr.rel (0) target = $region21
    $region20: #{tpu_custom_call.1} parent=1 // pred_region
      %45 = dma.done [#allocation6], 256
    $region21: #{tpu_custom_call.1} parent=1 // pred_fallthru
      _
    %v46 = vld [vmem:[#allocation2] sm:$0xff]
    %v47 = vld [vmem:[#allocation2 + $0x8] sm:$0xff]
    %v48 = vld [vmem:[#allocation5] sm:$0xff]
    %v49 = vld [vmem:[#allocation5 + $0x8] sm:$0xff]
    %v50 = vadd.f32 %v46, %v48
    %v51 = vadd.f32 %v47, %v49
    %v52 = vld [vmem:[%s2] sm:$0x1]
    %v54 = vcombine.high %v50, %v50
    %vm55 = vcmask 31744
    %v57 = vsel %vm55, %v52, 0
    %vm59 = vcmask 1043456
    %v60 = vsel %vm59, %v50, 0
    %v62 = vsel %vm59, %v54, 0
    %v64 = vand.u32 %v62, 4294901760
    %65 = vmatprep.subr.mxu0 %v64
    %v66 = vand.u32 %v60, 4294901760
    %67 = vmatpush1.msra.mxu0 %v66
    %68 = vmatprep.subr.mxu0 0.0
    %69 = vmatpush1.msra.mxu0 0.0
    %70 = vmatprep.subr.mxu0 0.0
    %71 = vmatpush1.msra.mxu0 0.0
    %72 = vmatprep.subr.mxu0 0.0
    %73 = vmatpush1.msra.mxu0 0.0
    %74 = vmatprep.subr.mxu0 0.0
    %75 = vmatpush1.msra.mxu0 0.0
    %76 = vmatprep.subr.mxu0 0.0
    %77 = vmatpush1.msra.mxu0 0.0
    %78 = vmatprep.subr.mxu0 0.0
    %79 = vmatpush1.msra.mxu0 0.0
    %80 = vmatprep.subr.mxu0 0.0
    %81 = vmatpush1.msra.mxu0 0.0
    %82 = vmatprep.subr.mxu0 0.0
    %83 = vmatpush1.msra.mxu0 0.0
    %84 = vmatprep.subr.mxu0 0.0
    %85 = vmatpush1.msra.mxu0 0.0
    %86 = vmatprep.subr.mxu0 0.0
    %87 = vmatpush1.msra.mxu0 0.0
    %88 = vmatprep.subr.mxu0 0.0
    %89 = vmatpush1.msra.mxu0 0.0
    %90 = vmatprep.subr.mxu0 0.0
    %91 = vmatpush1.msra.mxu0 0.0
    %92 = vmatprep.subr.mxu0 0.0
    %93 = vmatpush1.msra.mxu0 0.0
    %94 = vmatprep.subr.mxu0 0.0
    %95 = vmatpush1.msra.mxu0 0.0
    %96 = vmatprep.subr.mxu0 0.0
    %97 = vmatpush1.msra.mxu0 0.0
    %98 = vmatprep.subr.mxu0 0.0
    %99 = vmatpush1.msra.mxu0 0.0
    %100 = vmatprep.subr.mxu0 0.0
    %101 = vmatpush1.msra.mxu0 0.0
    %102 = vmatprep.subr.mxu0 0.0
    %103 = vmatpush1.msra.mxu0 0.0
    %104 = vmatprep.subr.mxu0 0.0
    %105 = vmatpush1.msra.mxu0 0.0
    %106 = vmatprep.subr.mxu0 0.0
    %107 = vmatpush1.msra.mxu0 0.0
    %108 = vmatprep.subr.mxu0 0.0
    %109 = vmatpush1.msra.mxu0 0.0
    %110 = vmatprep.subr.mxu0 0.0
    %111 = vmatpush1.msra.mxu0 0.0
    %112 = vmatprep.subr.mxu0 0.0
    %113 = vmatpush1.msra.mxu0 0.0
    %114 = vmatprep.subr.mxu0 0.0
    %115 = vmatpush1.msra.mxu0 0.0
    %116 = vmatprep.subr.mxu0 0.0
    %117 = vmatpush1.msra.mxu0 0.0
    %118 = vmatprep.subr.mxu0 0.0
    %119 = vmatpush1.msra.mxu0 0.0
    %120 = vmatprep.subr.mxu0 0.0
    %121 = vmatpush1.msra.mxu0 0.0
    %122 = vmatprep.subr.mxu0 0.0
    %123 = vmatpush1.msra.mxu0 0.0
    %124 = vmatprep.subr.mxu0 0.0
    %125 = vmatpush1.msra.mxu0 0.0
    %126 = vmatprep.subr.mxu0 0.0
    %127 = vmatpush1.msra.mxu0 0.0
    %128 = vmatprep.subr.mxu0 0.0
    %129 = vmatpush1.msra.mxu0 0.0
    %130 = vmatprep.mubr.f32.mxu0 0.0
    %v131 = vand.u32 %v57, 4294901760
    %v132 = vsub.f32 %v57, %v131
    %v133 = vand.u32 %v132, 4294901760
    %v134 = vsub.f32 %v132, %v133
    %v135 = vand.u32 %v134, 4294901760
    %136 = vmatmul.mubr.f32.gmra.mrb[0].mxu0 %v135
    %v137 = vpop.f32.mrb[0].mxu0
    %v138 = vadd.f32 0.0, %v137
    %v139 = vpop.f32.mrb[0].mxu0
    %v140 = vadd.f32 0.0, %v139
    %141 = vdwg.mxu0
    %v142 = vand.u32 %v62, 4294901760
    %v143 = vsub.f32 %v62, %v142
    %v144 = vand.u32 %v143, 4294901760
    %v145 = vsub.f32 %v143, %v144
    %v146 = vand.u32 %v145, 4294901760
    %147 = vmatprep.subr.mxu0 %v146
    %v148 = vand.u32 %v60, 4294901760
    %v149 = vsub.f32 %v60, %v148
    %v150 = vand.u32 %v149, 4294901760
    %v151 = vsub.f32 %v149, %v150
    %v152 = vand.u32 %v151, 4294901760
    %153 = vmatpush1.msra.mxu0 %v152
    %154 = vmatprep.subr.mxu0 0.0
    %155 = vmatpush1.msra.mxu0 0.0
    %156 = vmatprep.subr.mxu0 0.0
    %157 = vmatpush1.msra.mxu0 0.0
    %158 = vmatprep.subr.mxu0 0.0
    %159 = vmatpush1.msra.mxu0 0.0
    %160 = vmatprep.subr.mxu0 0.0
    %161 = vmatpush1.msra.mxu0 0.0
    %162 = vmatprep.subr.mxu0 0.0
    %163 = vmatpush1.msra.mxu0 0.0
    %164 = vmatprep.subr.mxu0 0.0
    %165 = vmatpush1.msra.mxu0 0.0
    %166 = vmatprep.subr.mxu0 0.0
    %167 = vmatpush1.msra.mxu0 0.0
    %168 = vmatprep.subr.mxu0 0.0
    %169 = vmatpush1.msra.mxu0 0.0
    %170 = vmatprep.subr.mxu0 0.0
    %171 = vmatpush1.msra.mxu0 0.0
    %172 = vmatprep.subr.mxu0 0.0
    %173 = vmatpush1.msra.mxu0 0.0
    %174 = vmatprep.subr.mxu0 0.0
    %175 = vmatpush1.msra.mxu0 0.0
    %176 = vmatprep.subr.mxu0 0.0
    %177 = vmatpush1.msra.mxu0 0.0
    %178 = vmatprep.subr.mxu0 0.0
    %179 = vmatpush1.msra.mxu0 0.0
    %180 = vmatprep.subr.mxu0 0.0
    %181 = vmatpush1.msra.mxu0 0.0
    %182 = vmatprep.subr.mxu0 0.0
    %183 = vmatpush1.msra.mxu0 0.0
    %184 = vmatprep.subr.mxu0 0.0
    %185 = vmatpush1.msra.mxu0 0.0
    %186 = vmatprep.subr.mxu0 0.0
    %187 = vmatpush1.msra.mxu0 0.0
    %188 = vmatprep.subr.mxu0 0.0
    %189 = vmatpush1.msra.mxu0 0.0
    %190 = vmatprep.subr.mxu0 0.0
    %191 = vmatpush1.msra.mxu0 0.0
    %192 = vmatprep.subr.mxu0 0.0
    %193 = vmatpush1.msra.mxu0 0.0
    %194 = vmatprep.subr.mxu0 0.0
    %195 = vmatpush1.msra.mxu0 0.0
    %196 = vmatprep.subr.mxu0 0.0
    %197 = vmatpush1.msra.mxu0 0.0
    %198 = vmatprep.subr.mxu0 0.0
    %199 = vmatpush1.msra.mxu0 0.0
    %200 = vmatprep.subr.mxu0 0.0
    %201 = vmatpush1.msra.mxu0 0.0
    %202 = vmatprep.subr.mxu0 0.0
    %203 = vmatpush1.msra.mxu0 0.0
    %204 = vmatprep.subr.mxu0 0.0
    %205 = vmatpush1.msra.mxu0 0.0
    %206 = vmatprep.subr.mxu0 0.0
    %207 = vmatpush1.msra.mxu0 0.0
    %208 = vmatprep.subr.mxu0 0.0
    %209 = vmatpush1.msra.mxu0 0.0
    %210 = vmatprep.subr.mxu0 0.0
    %211 = vmatpush1.msra.mxu0 0.0
    %212 = vmatprep.subr.mxu0 0.0
    %213 = vmatpush1.msra.mxu0 0.0
    %214 = vmatprep.subr.mxu0 0.0
    %215 = vmatpush1.msra.mxu0 0.0
    %216 = vmatprep.mubr.f32.mxu0 0.0
    %v217 = vand.u32 %v57, 4294901760
    %218 = vmatmul.mubr.f32.gmra.mrb[0].mxu0 %v217
    %v219 = vpop.f32.mrb[0].mxu0
    %v220 = vadd.f32 %v138, %v219
    %v221 = vpop.f32.mrb[0].mxu0
    %v222 = vadd.f32 %v140, %v221
    %223 = vdwg.mxu0
    %v224 = vand.u32 %v62, 4294901760
    %v225 = vsub.f32 %v62, %v224
    %226 = vmatprep.subr.mxu0 %v225
    %v227 = vand.u32 %v60, 4294901760
    %v228 = vsub.f32 %v60, %v227
    %229 = vmatpush1.msra.mxu0 %v228
    %230 = vmatprep.subr.mxu0 0.0
    %231 = vmatpush1.msra.mxu0 0.0
    %232 = vmatprep.subr.mxu0 0.0
    %233 = vmatpush1.msra.mxu0 0.0
    %234 = vmatprep.subr.mxu0 0.0
    %235 = vmatpush1.msra.mxu0 0.0
    %236 = vmatprep.subr.mxu0 0.0
    %237 = vmatpush1.msra.mxu0 0.0
    %238 = vmatprep.subr.mxu0 0.0
    %239 = vmatpush1.msra.mxu0 0.0
    %240 = vmatprep.subr.mxu0 0.0
    %241 = vmatpush1.msra.mxu0 0.0
    %242 = vmatprep.subr.mxu0 0.0
    %243 = vmatpush1.msra.mxu0 0.0
    %244 = vmatprep.subr.mxu0 0.0
    %245 = vmatpush1.msra.mxu0 0.0
    %246 = vmatprep.subr.mxu0 0.0
    %247 = vmatpush1.msra.mxu0 0.0
    %248 = vmatprep.subr.mxu0 0.0
    %249 = vmatpush1.msra.mxu0 0.0
    %250 = vmatprep.subr.mxu0 0.0
    %251 = vmatpush1.msra.mxu0 0.0
    %252 = vmatprep.subr.mxu0 0.0
    %253 = vmatpush1.msra.mxu0 0.0
    %254 = vmatprep.subr.mxu0 0.0
    %255 = vmatpush1.msra.mxu0 0.0
    %256 = vmatprep.subr.mxu0 0.0
    %257 = vmatpush1.msra.mxu0 0.0
    %258 = vmatprep.subr.mxu0 0.0
    %259 = vmatpush1.msra.mxu0 0.0
    %260 = vmatprep.subr.mxu0 0.0
    %261 = vmatpush1.msra.mxu0 0.0
    %262 = vmatprep.subr.mxu0 0.0
    %263 = vmatpush1.msra.mxu0 0.0
    %264 = vmatprep.subr.mxu0 0.0
    %265 = vmatpush1.msra.mxu0 0.0
    %266 = vmatprep.subr.mxu0 0.0
    %267 = vmatpush1.msra.mxu0 0.0
    %268 = vmatprep.subr.mxu0 0.0
    %269 = vmatpush1.msra.mxu0 0.0
    %270 = vmatprep.subr.mxu0 0.0
    %271 = vmatpush1.msra.mxu0 0.0
    %272 = vmatprep.subr.mxu0 0.0
    %273 = vmatpush1.msra.mxu0 0.0
    %274 = vmatprep.subr.mxu0 0.0
    %275 = vmatpush1.msra.mxu0 0.0
    %276 = vmatprep.subr.mxu0 0.0
    %277 = vmatpush1.msra.mxu0 0.0
    %278 = vmatprep.subr.mxu0 0.0
    %279 = vmatpush1.msra.mxu0 0.0
    %280 = vmatprep.subr.mxu0 0.0
    %281 = vmatpush1.msra.mxu0 0.0
    %282 = vmatprep.subr.mxu0 0.0
    %283 = vmatpush1.msra.mxu0 0.0
    %284 = vmatprep.subr.mxu0 0.0
    %285 = vmatpush1.msra.mxu0 0.0
    %286 = vmatprep.subr.mxu0 0.0
    %287 = vmatpush1.msra.mxu0 0.0
    %288 = vmatprep.subr.mxu0 0.0
    %289 = vmatpush1.msra.mxu0 0.0
    %290 = vmatprep.subr.mxu0 0.0
    %291 = vmatpush1.msra.mxu0 0.0
    %292 = vmatprep.mubr.f32.mxu0 0.0
    %v293 = vand.u32 %v57, 4294901760
    %v294 = vsub.f32 %v57, %v293
    %295 = vmatmul.mubr.f32.gmra.mrb[0].mxu0 %v294
    %v296 = vpop.f32.mrb[0].mxu0
    %v297 = vadd.f32 %v220, %v296
    %v298 = vpop.f32.mrb[0].mxu0
    %v299 = vadd.f32 %v222, %v298
    %300 = vdwg.mxu0
    %v301 = vand.u32 %v62, 4294901760
    %302 = vmatprep.subr.mxu0 %v301
    %v303 = vand.u32 %v60, 4294901760
    %304 = vmatpush1.msra.mxu0 %v303
    %305 = vmatprep.subr.mxu0 0.0
    %306 = vmatpush1.msra.mxu0 0.0
    %307 = vmatprep.subr.mxu0 0.0
    %308 = vmatpush1.msra.mxu0 0.0
    %309 = vmatprep.subr.mxu0 0.0
    %310 = vmatpush1.msra.mxu0 0.0
    %311 = vmatprep.subr.mxu0 0.0
    %312 = vmatpush1.msra.mxu0 0.0
    %313 = vmatprep.subr.mxu0 0.0
    %314 = vmatpush1.msra.mxu0 0.0
    %315 = vmatprep.subr.mxu0 0.0
    %316 = vmatpush1.msra.mxu0 0.0
    %317 = vmatprep.subr.mxu0 0.0
    %318 = vmatpush1.msra.mxu0 0.0
    %319 = vmatprep.subr.mxu0 0.0
    %320 = vmatpush1.msra.mxu0 0.0
    %321 = vmatprep.subr.mxu0 0.0
    %322 = vmatpush1.msra.mxu0 0.0
    %323 = vmatprep.subr.mxu0 0.0
    %324 = vmatpush1.msra.mxu0 0.0
    %325 = vmatprep.subr.mxu0 0.0
    %326 = vmatpush1.msra.mxu0 0.0
    %327 = vmatprep.subr.mxu0 0.0
    %328 = vmatpush1.msra.mxu0 0.0
    %329 = vmatprep.subr.mxu0 0.0
    %330 = vmatpush1.msra.mxu0 0.0
    %331 = vmatprep.subr.mxu0 0.0
    %332 = vmatpush1.msra.mxu0 0.0
    %333 = vmatprep.subr.mxu0 0.0
    %334 = vmatpush1.msra.mxu0 0.0
    %335 = vmatprep.subr.mxu0 0.0
    %336 = vmatpush1.msra.mxu0 0.0
    %337 = vmatprep.subr.mxu0 0.0
    %338 = vmatpush1.msra.mxu0 0.0
    %339 = vmatprep.subr.mxu0 0.0
    %340 = vmatpush1.msra.mxu0 0.0
    %341 = vmatprep.subr.mxu0 0.0
    %342 = vmatpush1.msra.mxu0 0.0
    %343 = vmatprep.subr.mxu0 0.0
    %344 = vmatpush1.msra.mxu0 0.0
    %345 = vmatprep.subr.mxu0 0.0
    %346 = vmatpush1.msra.mxu0 0.0
    %347 = vmatprep.subr.mxu0 0.0
    %348 = vmatpush1.msra.mxu0 0.0
    %349 = vmatprep.subr.mxu0 0.0
    %350 = vmatpush1.msra.mxu0 0.0
    %351 = vmatprep.subr.mxu0 0.0
    %352 = vmatpush1.msra.mxu0 0.0
    %353 = vmatprep.subr.mxu0 0.0
    %354 = vmatpush1.msra.mxu0 0.0
    %355 = vmatprep.subr.mxu0 0.0
    %356 = vmatpush1.msra.mxu0 0.0
    %357 = vmatprep.subr.mxu0 0.0
    %358 = vmatpush1.msra.mxu0 0.0
    %359 = vmatprep.subr.mxu0 0.0
    %360 = vmatpush1.msra.mxu0 0.0
    %361 = vmatprep.subr.mxu0 0.0
    %362 = vmatpush1.msra.mxu0 0.0
    %363 = vmatprep.subr.mxu0 0.0
    %364 = vmatpush1.msra.mxu0 0.0
    %365 = vmatprep.subr.mxu0 0.0
    %366 = vmatpush1.msra.mxu0 0.0
    %367 = vmatprep.mubr.f32.mxu0 0.0
    %v368 = vand.u32 %v57, 4294901760
    %v369 = vsub.f32 %v57, %v368
    %v370 = vand.u32 %v369, 4294901760
    %371 = vmatmul.mubr.f32.gmra.mrb[0].mxu0 %v370
    %v372 = vpop.f32.mrb[0].mxu0
    %v373 = vadd.f32 %v297, %v372
    %v374 = vpop.f32.mrb[0].mxu0
    %v375 = vadd.f32 %v299, %v374
    %376 = vdwg.mxu0
    %v377 = vand.u32 %v62, 4294901760
    %v378 = vsub.f32 %v62, %v377
    %v379 = vand.u32 %v378, 4294901760
    %380 = vmatprep.subr.mxu0 %v379
    %v381 = vand.u32 %v60, 4294901760
    %v382 = vsub.f32 %v60, %v381
    %v383 = vand.u32 %v382, 4294901760
    %384 = vmatpush1.msra.mxu0 %v383
    %385 = vmatprep.subr.mxu0 0.0
    %386 = vmatpush1.msra.mxu0 0.0
    %387 = vmatprep.subr.mxu0 0.0
    %388 = vmatpush1.msra.mxu0 0.0
    %389 = vmatprep.subr.mxu0 0.0
    %390 = vmatpush1.msra.mxu0 0.0
    %391 = vmatprep.subr.mxu0 0.0
    %392 = vmatpush1.msra.mxu0 0.0
    %393 = vmatprep.subr.mxu0 0.0
    %394 = vmatpush1.msra.mxu0 0.0
    %395 = vmatprep.subr.mxu0 0.0
    %396 = vmatpush1.msra.mxu0 0.0
    %397 = vmatprep.subr.mxu0 0.0
    %398 = vmatpush1.msra.mxu0 0.0
    %399 = vmatprep.subr.mxu0 0.0
    %400 = vmatpush1.msra.mxu0 0.0
    %401 = vmatprep.subr.mxu0 0.0
    %402 = vmatpush1.msra.mxu0 0.0
    %403 = vmatprep.subr.mxu0 0.0
    %404 = vmatpush1.msra.mxu0 0.0
    %405 = vmatprep.subr.mxu0 0.0
    %406 = vmatpush1.msra.mxu0 0.0
    %407 = vmatprep.subr.mxu0 0.0
    %408 = vmatpush1.msra.mxu0 0.0
    %409 = vmatprep.subr.mxu0 0.0
    %410 = vmatpush1.msra.mxu0 0.0
    %411 = vmatprep.subr.mxu0 0.0
    %412 = vmatpush1.msra.mxu0 0.0
    %413 = vmatprep.subr.mxu0 0.0
    %414 = vmatpush1.msra.mxu0 0.0
    %415 = vmatprep.subr.mxu0 0.0
    %416 = vmatpush1.msra.mxu0 0.0
    %417 = vmatprep.subr.mxu0 0.0
    %418 = vmatpush1.msra.mxu0 0.0
    %419 = vmatprep.subr.mxu0 0.0
    %420 = vmatpush1.msra.mxu0 0.0
    %421 = vmatprep.subr.mxu0 0.0
    %422 = vmatpush1.msra.mxu0 0.0
    %423 = vmatprep.subr.mxu0 0.0
    %424 = vmatpush1.msra.mxu0 0.0
    %425 = vmatprep.subr.mxu0 0.0
    %426 = vmatpush1.msra.mxu0 0.0
    %427 = vmatprep.subr.mxu0 0.0
    %428 = vmatpush1.msra.mxu0 0.0
    %429 = vmatprep.subr.mxu0 0.0
    %430 = vmatpush1.msra.mxu0 0.0
    %431 = vmatprep.subr.mxu0 0.0
    %432 = vmatpush1.msra.mxu0 0.0
    %433 = vmatprep.subr.mxu0 0.0
    %434 = vmatpush1.msra.mxu0 0.0
    %435 = vmatprep.subr.mxu0 0.0
    %436 = vmatpush1.msra.mxu0 0.0
    %437 = vmatprep.subr.mxu0 0.0
    %438 = vmatpush1.msra.mxu0 0.0
    %439 = vmatprep.subr.mxu0 0.0
    %440 = vmatpush1.msra.mxu0 0.0
    %441 = vmatprep.subr.mxu0 0.0
    %442 = vmatpush1.msra.mxu0 0.0
    %443 = vmatprep.subr.mxu0 0.0
    %444 = vmatpush1.msra.mxu0 0.0
    %445 = vmatprep.subr.mxu0 0.0
    %446 = vmatpush1.msra.mxu0 0.0
    %447 = vmatprep.mubr.f32.mxu0 0.0
    %v448 = vand.u32 %v57, 4294901760
    %449 = vmatmul.mubr.f32.gmra.mrb[0].mxu0 %v448
    %v450 = vpop.f32.mrb[0].mxu0
    %v451 = vadd.f32 %v373, %v450
    %v452 = vpop.f32.mrb[0].mxu0
    %v453 = vadd.f32 %v375, %v452
    %454 = vdwg.mxu0
    %v455 = vand.u32 %v62, 4294901760
    %456 = vmatprep.subr.mxu0 %v455
    %v457 = vand.u32 %v60, 4294901760
    %458 = vmatpush1.msra.mxu0 %v457
    %459 = vmatprep.subr.mxu0 0.0
    %460 = vmatpush1.msra.mxu0 0.0
    %461 = vmatprep.subr.mxu0 0.0
    %462 = vmatpush1.msra.mxu0 0.0
    %463 = vmatprep.subr.mxu0 0.0
    %464 = vmatpush1.msra.mxu0 0.0
    %465 = vmatprep.subr.mxu0 0.0
    %466 = vmatpush1.msra.mxu0 0.0
    %467 = vmatprep.subr.mxu0 0.0
    %468 = vmatpush1.msra.mxu0 0.0
    %469 = vmatprep.subr.mxu0 0.0
    %470 = vmatpush1.msra.mxu0 0.0
    %471 = vmatprep.subr.mxu0 0.0
    %472 = vmatpush1.msra.mxu0 0.0
    %473 = vmatprep.subr.mxu0 0.0
    %474 = vmatpush1.msra.mxu0 0.0
    %475 = vmatprep.subr.mxu0 0.0
    %476 = vmatpush1.msra.mxu0 0.0
    %477 = vmatprep.subr.mxu0 0.0
    %478 = vmatpush1.msra.mxu0 0.0
    %479 = vmatprep.subr.mxu0 0.0
    %480 = vmatpush1.msra.mxu0 0.0
    %481 = vmatprep.subr.mxu0 0.0
    %482 = vmatpush1.msra.mxu0 0.0
    %483 = vmatprep.subr.mxu0 0.0
    %484 = vmatpush1.msra.mxu0 0.0
    %485 = vmatprep.subr.mxu0 0.0
    %486 = vmatpush1.msra.mxu0 0.0
    %487 = vmatprep.subr.mxu0 0.0
    %488 = vmatpush1.msra.mxu0 0.0
    %489 = vmatprep.subr.mxu0 0.0
    %490 = vmatpush1.msra.mxu0 0.0
    %491 = vmatprep.subr.mxu0 0.0
    %492 = vmatpush1.msra.mxu0 0.0
    %493 = vmatprep.subr.mxu0 0.0
    %494 = vmatpush1.msra.mxu0 0.0
    %495 = vmatprep.subr.mxu0 0.0
    %496 = vmatpush1.msra.mxu0 0.0
    %497 = vmatprep.subr.mxu0 0.0
    %498 = vmatpush1.msra.mxu0 0.0
    %499 = vmatprep.subr.mxu0 0.0
    %500 = vmatpush1.msra.mxu0 0.0
    %501 = vmatprep.subr.mxu0 0.0
    %502 = vmatpush1.msra.mxu0 0.0
    %503 = vmatprep.subr.mxu0 0.0
    %504 = vmatpush1.msra.mxu0 0.0
    %505 = vmatprep.subr.mxu0 0.0
    %506 = vmatpush1.msra.mxu0 0.0
    %507 = vmatprep.subr.mxu0 0.0
    %508 = vmatpush1.msra.mxu0 0.0
    %509 = vmatprep.subr.mxu0 0.0
    %510 = vmatpush1.msra.mxu0 0.0
    %511 = vmatprep.subr.mxu0 0.0
    %512 = vmatpush1.msra.mxu0 0.0
    %513 = vmatprep.subr.mxu0 0.0
    %514 = vmatpush1.msra.mxu0 0.0
    %515 = vmatprep.subr.mxu0 0.0
    %516 = vmatpush1.msra.mxu0 0.0
    %517 = vmatprep.subr.mxu0 0.0
    %518 = vmatpush1.msra.mxu0 0.0
    %519 = vmatprep.subr.mxu0 0.0
    %520 = vmatpush1.msra.mxu0 0.0
    %521 = vmatprep.mubr.f32.mxu0 0.0
    %v522 = vand.u32 %v57, 4294901760
    %523 = vmatmul.mubr.f32.gmra.mrb[0].mxu0 %v522
    %v524 = vpop.f32.mrb[0].mxu0
    %v525 = vadd.f32 %v451, %v524
    %v526 = vpop.f32.mrb[0].mxu0
    %v527 = vadd.f32 %v453, %v526
    %528 = vdwg.mxu0
    %v530 = vcombine.high %v51, %v51
    %v531 = vsel %vm59, %v51, 0
    %v533 = vsel %vm59, %v530, 0
    %v535 = vand.u32 %v533, 4294901760
    %536 = vmatprep.subr.mxu0 %v535
    %v537 = vand.u32 %v531, 4294901760
    %538 = vmatpush1.msra.mxu0 %v537
    %539 = vmatprep.subr.mxu0 0.0
    %540 = vmatpush1.msra.mxu0 0.0
    %541 = vmatprep.subr.mxu0 0.0
    %542 = vmatpush1.msra.mxu0 0.0
    %543 = vmatprep.subr.mxu0 0.0
    %544 = vmatpush1.msra.mxu0 0.0
    %545 = vmatprep.subr.mxu0 0.0
    %546 = vmatpush1.msra.mxu0 0.0
    %547 = vmatprep.subr.mxu0 0.0
    %548 = vmatpush1.msra.mxu0 0.0
    %549 = vmatprep.subr.mxu0 0.0
    %550 = vmatpush1.msra.mxu0 0.0
    %551 = vmatprep.subr.mxu0 0.0
    %552 = vmatpush1.msra.mxu0 0.0
    %553 = vmatprep.subr.mxu0 0.0
    %554 = vmatpush1.msra.mxu0 0.0
    %555 = vmatprep.subr.mxu0 0.0
    %556 = vmatpush1.msra.mxu0 0.0
    %557 = vmatprep.subr.mxu0 0.0
    %558 = vmatpush1.msra.mxu0 0.0
    %559 = vmatprep.subr.mxu0 0.0
    %560 = vmatpush1.msra.mxu0 0.0
    %561 = vmatprep.subr.mxu0 0.0
    %562 = vmatpush1.msra.mxu0 0.0
    %563 = vmatprep.subr.mxu0 0.0
    %564 = vmatpush1.msra.mxu0 0.0
    %565 = vmatprep.subr.mxu0 0.0
    %566 = vmatpush1.msra.mxu0 0.0
    %567 = vmatprep.subr.mxu0 0.0
    %568 = vmatpush1.msra.mxu0 0.0
    %569 = vmatprep.subr.mxu0 0.0
    %570 = vmatpush1.msra.mxu0 0.0
    %571 = vmatprep.subr.mxu0 0.0
    %572 = vmatpush1.msra.mxu0 0.0
    %573 = vmatprep.subr.mxu0 0.0
    %574 = vmatpush1.msra.mxu0 0.0
    %575 = vmatprep.subr.mxu0 0.0
    %576 = vmatpush1.msra.mxu0 0.0
    %577 = vmatprep.subr.mxu0 0.0
    %578 = vmatpush1.msra.mxu0 0.0
    %579 = vmatprep.subr.mxu0 0.0
    %580 = vmatpush1.msra.mxu0 0.0
    %581 = vmatprep.subr.mxu0 0.0
    %582 = vmatpush1.msra.mxu0 0.0
    %583 = vmatprep.subr.mxu0 0.0
    %584 = vmatpush1.msra.mxu0 0.0
    %585 = vmatprep.subr.mxu0 0.0
    %586 = vmatpush1.msra.mxu0 0.0
    %587 = vmatprep.subr.mxu0 0.0
    %588 = vmatpush1.msra.mxu0 0.0
    %589 = vmatprep.subr.mxu0 0.0
    %590 = vmatpush1.msra.mxu0 0.0
    %591 = vmatprep.subr.mxu0 0.0
    %592 = vmatpush1.msra.mxu0 0.0
    %593 = vmatprep.subr.mxu0 0.0
    %594 = vmatpush1.msra.mxu0 0.0
    %595 = vmatprep.subr.mxu0 0.0
    %596 = vmatpush1.msra.mxu0 0.0
    %597 = vmatprep.subr.mxu0 0.0
    %598 = vmatpush1.msra.mxu0 0.0
    %599 = vmatprep.subr.mxu0 0.0
    %600 = vmatpush1.msra.mxu0 0.0
    %601 = vmatprep.mubr.f32.mxu0 0.0
    %v602 = vand.u32 %v57, 4294901760
    %v603 = vsub.f32 %v57, %v602
    %v604 = vand.u32 %v603, 4294901760
    %v605 = vsub.f32 %v603, %v604
    %v606 = vand.u32 %v605, 4294901760
    %607 = vmatmul.mubr.f32.gmra.mrb[0].mxu0 %v606
    %v608 = vpop.f32.mrb[0].mxu0
    %v609 = vadd.f32 0.0, %v608
    %v610 = vpop.f32.mrb[0].mxu0
    %v611 = vadd.f32 0.0, %v610
    %612 = vdwg.mxu0
    %v613 = vand.u32 %v533, 4294901760
    %v614 = vsub.f32 %v533, %v613
    %v615 = vand.u32 %v614, 4294901760
    %v616 = vsub.f32 %v614, %v615
    %v617 = vand.u32 %v616, 4294901760
    %618 = vmatprep.subr.mxu0 %v617
    %v619 = vand.u32 %v531, 4294901760
    %v620 = vsub.f32 %v531, %v619
    %v621 = vand.u32 %v620, 4294901760
    %v622 = vsub.f32 %v620, %v621
    %v623 = vand.u32 %v622, 4294901760
    %624 = vmatpush1.msra.mxu0 %v623
    %625 = vmatprep.subr.mxu0 0.0
    %626 = vmatpush1.msra.mxu0 0.0
    %627 = vmatprep.subr.mxu0 0.0
    %628 = vmatpush1.msra.mxu0 0.0
    %629 = vmatprep.subr.mxu0 0.0
    %630 = vmatpush1.msra.mxu0 0.0
    %631 = vmatprep.subr.mxu0 0.0
    %632 = vmatpush1.msra.mxu0 0.0
    %633 = vmatprep.subr.mxu0 0.0
    %634 = vmatpush1.msra.mxu0 0.0
    %635 = vmatprep.subr.mxu0 0.0
    %636 = vmatpush1.msra.mxu0 0.0
    %637 = vmatprep.subr.mxu0 0.0
    %638 = vmatpush1.msra.mxu0 0.0
    %639 = vmatprep.subr.mxu0 0.0
    %640 = vmatpush1.msra.mxu0 0.0
    %641 = vmatprep.subr.mxu0 0.0
    %642 = vmatpush1.msra.mxu0 0.0
    %643 = vmatprep.subr.mxu0 0.0
    %644 = vmatpush1.msra.mxu0 0.0
    %645 = vmatprep.subr.mxu0 0.0
    %646 = vmatpush1.msra.mxu0 0.0
    %647 = vmatprep.subr.mxu0 0.0
    %648 = vmatpush1.msra.mxu0 0.0
    %649 = vmatprep.subr.mxu0 0.0
    %650 = vmatpush1.msra.mxu0 0.0
    %651 = vmatprep.subr.mxu0 0.0
    %652 = vmatpush1.msra.mxu0 0.0
    %653 = vmatprep.subr.mxu0 0.0
    %654 = vmatpush1.msra.mxu0 0.0
    %655 = vmatprep.subr.mxu0 0.0
    %656 = vmatpush1.msra.mxu0 0.0
    %657 = vmatprep.subr.mxu0 0.0
    %658 = vmatpush1.msra.mxu0 0.0
    %659 = vmatprep.subr.mxu0 0.0
    %660 = vmatpush1.msra.mxu0 0.0
    %661 = vmatprep.subr.mxu0 0.0
    %662 = vmatpush1.msra.mxu0 0.0
    %663 = vmatprep.subr.mxu0 0.0
    %664 = vmatpush1.msra.mxu0 0.0
    %665 = vmatprep.subr.mxu0 0.0
    %666 = vmatpush1.msra.mxu0 0.0
    %667 = vmatprep.subr.mxu0 0.0
    %668 = vmatpush1.msra.mxu0 0.0
    %669 = vmatprep.subr.mxu0 0.0
    %670 = vmatpush1.msra.mxu0 0.0
    %671 = vmatprep.subr.mxu0 0.0
    %672 = vmatpush1.msra.mxu0 0.0
    %673 = vmatprep.subr.mxu0 0.0
    %674 = vmatpush1.msra.mxu0 0.0
    %675 = vmatprep.subr.mxu0 0.0
    %676 = vmatpush1.msra.mxu0 0.0
    %677 = vmatprep.subr.mxu0 0.0
    %678 = vmatpush1.msra.mxu0 0.0
    %679 = vmatprep.subr.mxu0 0.0
    %680 = vmatpush1.msra.mxu0 0.0
    %681 = vmatprep.subr.mxu0 0.0
    %682 = vmatpush1.msra.mxu0 0.0
    %683 = vmatprep.subr.mxu0 0.0
    %684 = vmatpush1.msra.mxu0 0.0
    %685 = vmatprep.subr.mxu0 0.0
    %686 = vmatpush1.msra.mxu0 0.0
    %687 = vmatprep.mubr.f32.mxu0 0.0
    %v688 = vand.u32 %v57, 4294901760
    %689 = vmatmul.mubr.f32.gmra.mrb[0].mxu0 %v688
    %v690 = vpop.f32.mrb[0].mxu0
    %v691 = vadd.f32 %v609, %v690
    %v692 = vpop.f32.mrb[0].mxu0
    %v693 = vadd.f32 %v611, %v692
    %694 = vdwg.mxu0
    %v695 = vand.u32 %v533, 4294901760
    %v696 = vsub.f32 %v533, %v695
    %697 = vmatprep.subr.mxu0 %v696
    %v698 = vand.u32 %v531, 4294901760
    %v699 = vsub.f32 %v531, %v698
    %700 = vmatpush1.msra.mxu0 %v699
    %701 = vmatprep.subr.mxu0 0.0
    %702 = vmatpush1.msra.mxu0 0.0
    %703 = vmatprep.subr.mxu0 0.0
    %704 = vmatpush1.msra.mxu0 0.0
    %705 = vmatprep.subr.mxu0 0.0
    %706 = vmatpush1.msra.mxu0 0.0
    %707 = vmatprep.subr.mxu0 0.0
    %708 = vmatpush1.msra.mxu0 0.0
    %709 = vmatprep.subr.mxu0 0.0
    %710 = vmatpush1.msra.mxu0 0.0
    %711 = vmatprep.subr.mxu0 0.0
    %712 = vmatpush1.msra.mxu0 0.0
    %713 = vmatprep.subr.mxu0 0.0
    %714 = vmatpush1.msra.mxu0 0.0
    %715 = vmatprep.subr.mxu0 0.0
    %716 = vmatpush1.msra.mxu0 0.0
    %717 = vmatprep.subr.mxu0 0.0
    %718 = vmatpush1.msra.mxu0 0.0
    %719 = vmatprep.subr.mxu0 0.0
    %720 = vmatpush1.msra.mxu0 0.0
    %721 = vmatprep.subr.mxu0 0.0
    %722 = vmatpush1.msra.mxu0 0.0
    %723 = vmatprep.subr.mxu0 0.0
    %724 = vmatpush1.msra.mxu0 0.0
    %725 = vmatprep.subr.mxu0 0.0
    %726 = vmatpush1.msra.mxu0 0.0
    %727 = vmatprep.subr.mxu0 0.0
    %728 = vmatpush1.msra.mxu0 0.0
    %729 = vmatprep.subr.mxu0 0.0
    %730 = vmatpush1.msra.mxu0 0.0
    %731 = vmatprep.subr.mxu0 0.0
    %732 = vmatpush1.msra.mxu0 0.0
    %733 = vmatprep.subr.mxu0 0.0
    %734 = vmatpush1.msra.mxu0 0.0
    %735 = vmatprep.subr.mxu0 0.0
    %736 = vmatpush1.msra.mxu0 0.0
    %737 = vmatprep.subr.mxu0 0.0
    %738 = vmatpush1.msra.mxu0 0.0
    %739 = vmatprep.subr.mxu0 0.0
    %740 = vmatpush1.msra.mxu0 0.0
    %741 = vmatprep.subr.mxu0 0.0
    %742 = vmatpush1.msra.mxu0 0.0
    %743 = vmatprep.subr.mxu0 0.0
    %744 = vmatpush1.msra.mxu0 0.0
    %745 = vmatprep.subr.mxu0 0.0
    %746 = vmatpush1.msra.mxu0 0.0
    %747 = vmatprep.subr.mxu0 0.0
    %748 = vmatpush1.msra.mxu0 0.0
    %749 = vmatprep.subr.mxu0 0.0
    %750 = vmatpush1.msra.mxu0 0.0
    %751 = vmatprep.subr.mxu0 0.0
    %752 = vmatpush1.msra.mxu0 0.0
    %753 = vmatprep.subr.mxu0 0.0
    %754 = vmatpush1.msra.mxu0 0.0
    %755 = vmatprep.subr.mxu0 0.0
    %756 = vmatpush1.msra.mxu0 0.0
    %757 = vmatprep.subr.mxu0 0.0
    %758 = vmatpush1.msra.mxu0 0.0
    %759 = vmatprep.subr.mxu0 0.0
    %760 = vmatpush1.msra.mxu0 0.0
    %761 = vmatprep.subr.mxu0 0.0
    %762 = vmatpush1.msra.mxu0 0.0
    %763 = vmatprep.mubr.f32.mxu0 0.0
    %v764 = vand.u32 %v57, 4294901760
    %v765 = vsub.f32 %v57, %v764
    %766 = vmatmul.mubr.f32.gmra.mrb[0].mxu0 %v765
    %v767 = vpop.f32.mrb[0].mxu0
    %v768 = vadd.f32 %v691, %v767
    %v769 = vpop.f32.mrb[0].mxu0
    %v770 = vadd.f32 %v693, %v769
    %771 = vdwg.mxu0
    %v772 = vand.u32 %v533, 4294901760
    %773 = vmatprep.subr.mxu0 %v772
    %v774 = vand.u32 %v531, 4294901760
    %775 = vmatpush1.msra.mxu0 %v774
    %776 = vmatprep.subr.mxu0 0.0
    %777 = vmatpush1.msra.mxu0 0.0
    %778 = vmatprep.subr.mxu0 0.0
    %779 = vmatpush1.msra.mxu0 0.0
    %780 = vmatprep.subr.mxu0 0.0
    %781 = vmatpush1.msra.mxu0 0.0
    %782 = vmatprep.subr.mxu0 0.0
    %783 = vmatpush1.msra.mxu0 0.0
    %784 = vmatprep.subr.mxu0 0.0
    %785 = vmatpush1.msra.mxu0 0.0
    %786 = vmatprep.subr.mxu0 0.0
    %787 = vmatpush1.msra.mxu0 0.0
    %788 = vmatprep.subr.mxu0 0.0
    %789 = vmatpush1.msra.mxu0 0.0
    %790 = vmatprep.subr.mxu0 0.0
    %791 = vmatpush1.msra.mxu0 0.0
    %792 = vmatprep.subr.mxu0 0.0
    %793 = vmatpush1.msra.mxu0 0.0
    %794 = vmatprep.subr.mxu0 0.0
    %795 = vmatpush1.msra.mxu0 0.0
    %796 = vmatprep.subr.mxu0 0.0
    %797 = vmatpush1.msra.mxu0 0.0
    %798 = vmatprep.subr.mxu0 0.0
    %799 = vmatpush1.msra.mxu0 0.0
    %800 = vmatprep.subr.mxu0 0.0
    %801 = vmatpush1.msra.mxu0 0.0
    %802 = vmatprep.subr.mxu0 0.0
    %803 = vmatpush1.msra.mxu0 0.0
    %804 = vmatprep.subr.mxu0 0.0
    %805 = vmatpush1.msra.mxu0 0.0
    %806 = vmatprep.subr.mxu0 0.0
    %807 = vmatpush1.msra.mxu0 0.0
    %808 = vmatprep.subr.mxu0 0.0
    %809 = vmatpush1.msra.mxu0 0.0
    %810 = vmatprep.subr.mxu0 0.0
    %811 = vmatpush1.msra.mxu0 0.0
    %812 = vmatprep.subr.mxu0 0.0
    %813 = vmatpush1.msra.mxu0 0.0
    %814 = vmatprep.subr.mxu0 0.0
    %815 = vmatpush1.msra.mxu0 0.0
    %816 = vmatprep.subr.mxu0 0.0
    %817 = vmatpush1.msra.mxu0 0.0
    %818 = vmatprep.subr.mxu0 0.0
    %819 = vmatpush1.msra.mxu0 0.0
    %820 = vmatprep.subr.mxu0 0.0
    %821 = vmatpush1.msra.mxu0 0.0
    %822 = vmatprep.subr.mxu0 0.0
    %823 = vmatpush1.msra.mxu0 0.0
    %824 = vmatprep.subr.mxu0 0.0
    %825 = vmatpush1.msra.mxu0 0.0
    %826 = vmatprep.subr.mxu0 0.0
    %827 = vmatpush1.msra.mxu0 0.0
    %828 = vmatprep.subr.mxu0 0.0
    %829 = vmatpush1.msra.mxu0 0.0
    %830 = vmatprep.subr.mxu0 0.0
    %831 = vmatpush1.msra.mxu0 0.0
    %832 = vmatprep.subr.mxu0 0.0
    %833 = vmatpush1.msra.mxu0 0.0
    %834 = vmatprep.subr.mxu0 0.0
    %835 = vmatpush1.msra.mxu0 0.0
    %836 = vmatprep.subr.mxu0 0.0
    %837 = vmatpush1.msra.mxu0 0.0
    %838 = vmatprep.mubr.f32.mxu0 0.0
    %v839 = vand.u32 %v57, 4294901760
    %v840 = vsub.f32 %v57, %v839
    %v841 = vand.u32 %v840, 4294901760
    %842 = vmatmul.mubr.f32.gmra.mrb[0].mxu0 %v841
    %v843 = vpop.f32.mrb[0].mxu0
    %v844 = vadd.f32 %v768, %v843
    %v845 = vpop.f32.mrb[0].mxu0
    %v846 = vadd.f32 %v770, %v845
    %847 = vdwg.mxu0
    %v848 = vand.u32 %v533, 4294901760
    %v849 = vsub.f32 %v533, %v848
    %v850 = vand.u32 %v849, 4294901760
    %851 = vmatprep.subr.mxu0 %v850
    %v852 = vand.u32 %v531, 4294901760
    %v853 = vsub.f32 %v531, %v852
    %v854 = vand.u32 %v853, 4294901760
    %855 = vmatpush1.msra.mxu0 %v854
    %856 = vmatprep.subr.mxu0 0.0
    %857 = vmatpush1.msra.mxu0 0.0
    %858 = vmatprep.subr.mxu0 0.0
    %859 = vmatpush1.msra.mxu0 0.0
    %860 = vmatprep.subr.mxu0 0.0
    %861 = vmatpush1.msra.mxu0 0.0
    %862 = vmatprep.subr.mxu0 0.0
    %863 = vmatpush1.msra.mxu0 0.0
    %864 = vmatprep.subr.mxu0 0.0
    %865 = vmatpush1.msra.mxu0 0.0
    %866 = vmatprep.subr.mxu0 0.0
    %867 = vmatpush1.msra.mxu0 0.0
    %868 = vmatprep.subr.mxu0 0.0
    %869 = vmatpush1.msra.mxu0 0.0
    %870 = vmatprep.subr.mxu0 0.0
    %871 = vmatpush1.msra.mxu0 0.0
    %872 = vmatprep.subr.mxu0 0.0
    %873 = vmatpush1.msra.mxu0 0.0
    %874 = vmatprep.subr.mxu0 0.0
    %875 = vmatpush1.msra.mxu0 0.0
    %876 = vmatprep.subr.mxu0 0.0
    %877 = vmatpush1.msra.mxu0 0.0
    %878 = vmatprep.subr.mxu0 0.0
    %879 = vmatpush1.msra.mxu0 0.0
    %880 = vmatprep.subr.mxu0 0.0
    %881 = vmatpush1.msra.mxu0 0.0
    %882 = vmatprep.subr.mxu0 0.0
    %883 = vmatpush1.msra.mxu0 0.0
    %884 = vmatprep.subr.mxu0 0.0
    %885 = vmatpush1.msra.mxu0 0.0
    %886 = vmatprep.subr.mxu0 0.0
    %887 = vmatpush1.msra.mxu0 0.0
    %888 = vmatprep.subr.mxu0 0.0
    %889 = vmatpush1.msra.mxu0 0.0
    %890 = vmatprep.subr.mxu0 0.0
    %891 = vmatpush1.msra.mxu0 0.0
    %892 = vmatprep.subr.mxu0 0.0
    %893 = vmatpush1.msra.mxu0 0.0
    %894 = vmatprep.subr.mxu0 0.0
    %895 = vmatpush1.msra.mxu0 0.0
    %896 = vmatprep.subr.mxu0 0.0
    %897 = vmatpush1.msra.mxu0 0.0
    %898 = vmatprep.subr.mxu0 0.0
    %899 = vmatpush1.msra.mxu0 0.0
    %900 = vmatprep.subr.mxu0 0.0
    %901 = vmatpush1.msra.mxu0 0.0
    %902 = vmatprep.subr.mxu0 0.0
    %903 = vmatpush1.msra.mxu0 0.0
    %904 = vmatprep.subr.mxu0 0.0
    %905 = vmatpush1.msra.mxu0 0.0
    %906 = vmatprep.subr.mxu0 0.0
    %907 = vmatpush1.msra.mxu0 0.0
    %908 = vmatprep.subr.mxu0 0.0
    %909 = vmatpush1.msra.mxu0 0.0
    %910 = vmatprep.subr.mxu0 0.0
    %911 = vmatpush1.msra.mxu0 0.0
    %912 = vmatprep.subr.mxu0 0.0
    %913 = vmatpush1.msra.mxu0 0.0
    %914 = vmatprep.subr.mxu0 0.0
    %915 = vmatpush1.msra.mxu0 0.0
    %916 = vmatprep.subr.mxu0 0.0
    %917 = vmatpush1.msra.mxu0 0.0
    %918 = vmatprep.mubr.f32.mxu0 0.0
    %v919 = vand.u32 %v57, 4294901760
    %920 = vmatmul.mubr.f32.gmra.mrb[0].mxu0 %v919
    %v921 = vpop.f32.mrb[0].mxu0
    %v922 = vadd.f32 %v844, %v921
    %v923 = vpop.f32.mrb[0].mxu0
    %v924 = vadd.f32 %v846, %v923
    %925 = vdwg.mxu0
    %v926 = vand.u32 %v533, 4294901760
    %927 = vmatprep.subr.mxu0 %v926
    %v928 = vand.u32 %v531, 4294901760
    %929 = vmatpush1.msra.mxu0 %v928
    %930 = vmatprep.subr.mxu0 0.0
    %931 = vmatpush1.msra.mxu0 0.0
    %932 = vmatprep.subr.mxu0 0.0
    %933 = vmatpush1.msra.mxu0 0.0
    %934 = vmatprep.subr.mxu0 0.0
    %935 = vmatpush1.msra.mxu0 0.0
    %936 = vmatprep.subr.mxu0 0.0
    %937 = vmatpush1.msra.mxu0 0.0
    %938 = vmatprep.subr.mxu0 0.0
    %939 = vmatpush1.msra.mxu0 0.0
    %940 = vmatprep.subr.mxu0 0.0
    %941 = vmatpush1.msra.mxu0 0.0
    %942 = vmatprep.subr.mxu0 0.0
    %943 = vmatpush1.msra.mxu0 0.0
    %944 = vmatprep.subr.mxu0 0.0
    %945 = vmatpush1.msra.mxu0 0.0
    %946 = vmatprep.subr.mxu0 0.0
    %947 = vmatpush1.msra.mxu0 0.0
    %948 = vmatprep.subr.mxu0 0.0
    %949 = vmatpush1.msra.mxu0 0.0
    %950 = vmatprep.subr.mxu0 0.0
    %951 = vmatpush1.msra.mxu0 0.0
    %952 = vmatprep.subr.mxu0 0.0
    %953 = vmatpush1.msra.mxu0 0.0
    %954 = vmatprep.subr.mxu0 0.0
    %955 = vmatpush1.msra.mxu0 0.0
    %956 = vmatprep.subr.mxu0 0.0
    %957 = vmatpush1.msra.mxu0 0.0
    %958 = vmatprep.subr.mxu0 0.0
    %959 = vmatpush1.msra.mxu0 0.0
    %960 = vmatprep.subr.mxu0 0.0
    %961 = vmatpush1.msra.mxu0 0.0
    %962 = vmatprep.subr.mxu0 0.0
    %963 = vmatpush1.msra.mxu0 0.0
    %964 = vmatprep.subr.mxu0 0.0
    %965 = vmatpush1.msra.mxu0 0.0
    %966 = vmatprep.subr.mxu0 0.0
    %967 = vmatpush1.msra.mxu0 0.0
    %968 = vmatprep.subr.mxu0 0.0
    %969 = vmatpush1.msra.mxu0 0.0
    %970 = vmatprep.subr.mxu0 0.0
    %971 = vmatpush1.msra.mxu0 0.0
    %972 = vmatprep.subr.mxu0 0.0
    %973 = vmatpush1.msra.mxu0 0.0
    %974 = vmatprep.subr.mxu0 0.0
    %975 = vmatpush1.msra.mxu0 0.0
    %976 = vmatprep.subr.mxu0 0.0
    %977 = vmatpush1.msra.mxu0 0.0
    %978 = vmatprep.subr.mxu0 0.0
    %979 = vmatpush1.msra.mxu0 0.0
    %980 = vmatprep.subr.mxu0 0.0
    %981 = vmatpush1.msra.mxu0 0.0
    %982 = vmatprep.subr.mxu0 0.0
    %983 = vmatpush1.msra.mxu0 0.0
    %984 = vmatprep.subr.mxu0 0.0
    %985 = vmatpush1.msra.mxu0 0.0
    %986 = vmatprep.subr.mxu0 0.0
    %987 = vmatpush1.msra.mxu0 0.0
    %988 = vmatprep.subr.mxu0 0.0
    %989 = vmatpush1.msra.mxu0 0.0
    %990 = vmatprep.subr.mxu0 0.0
    %991 = vmatpush1.msra.mxu0 0.0
    %992 = vmatprep.mubr.f32.mxu0 0.0
    %v993 = vand.u32 %v57, 4294901760
    %994 = vmatmul.mubr.f32.gmra.mrb[0].mxu0 %v993
    %v995 = vpop.f32.mrb[0].mxu0
    %v996 = vadd.f32 %v922, %v995
    %v997 = vpop.f32.mrb[0].mxu0
    %v998 = vadd.f32 %v924, %v997
    %999 = vdwg.mxu0
    %v1004 = vcombine.low %v525, %v527
    %v1006 = vunpack.c.l.s4 1966171168
    %v1007 = vunpack.c.0.s8 %v1006
    %v1008 = vlaneseq
    %v1009 = vshrl.u32 %v1008, 7
    %v1010 = vsub.s32 %v1007, %v1009
    %v1011 = vrot.slane %v1004, %v1010
    %v1013 = vunpack.c.l.s4 1966171168
    %v1014 = vunpack.c.0.s8 %v1013
    %v1015 = vlaneseq
    %v1016 = vshrl.u32 %v1015, 7
    %v1017 = vsub.s32 %v1014, %v1016
    %v1018 = vrot.slane %v1011, %v1017
    %v1019 = vcombine.low %v996, %v998
    %v1021 = vunpack.c.l.s4 1966171168
    %v1022 = vunpack.c.0.s8 %v1021
    %v1023 = vlaneseq
    %v1024 = vshrl.u32 %v1023, 7
    %v1025 = vsub.s32 %v1022, %v1024
    %v1026 = vrot.slane %v1019, %v1025
    %v1028 = vunpack.c.l.s4 1966171168
    %v1029 = vunpack.c.0.s8 %v1028
    %v1030 = vlaneseq
    %v1031 = vshrl.u32 %v1030, 7
    %v1032 = vsub.s32 %v1029, %v1031
    %v1033 = vrot.slane %v1026, %v1032
    %v1036 = vlaneseq
    %vm1037 = vcmp.ge.s32.totalorder %v1036, 0
    %vm1038 = vcmp.lt.s32.totalorder %v1036, 256
    %vm1039 = vmand %vm1037, %vm1038
    %1040 = vst.msk [vmem:[#allocation7] sm:$0x3] %vm1039, %v1018
    %1041 = vst.msk [vmem:[#allocation7 + $0x2] sm:$0x3] %vm1039, %v1033
    %vm1042 = vcmask 1040384
    %v1043 = vsel %vm1042, %v525, -inf
    %v1044 = vsel %vm1042, %v527, -inf
    %v1045 = vmax.f32 %v1043, %v1044
    %1046 = vmax.xlane.f32.xlu0 %v1045
    %v1047 = vpop.xlane.xlu0 %1046
    %v1048 = vsel %vm1042, %v996, -inf
    %v1049 = vsel %vm1042, %v998, -inf
    %v1050 = vmax.f32 %v1048, %v1049
    %1051 = vmax.xlane.f32.xlu0 %v1050
    %v1052 = vpop.xlane.xlu0 %1051
    %v1053 = vsub.f32 %v525, %v1047
    %v1054 = vsub.f32 %v527, %v1047
    %v1055 = vsub.f32 %v996, %v1052
    %v1056 = vsub.f32 %v998, %v1052
    %v1057 = vmul.f32 %v1053, 1.442695
    %v1058 = vpow.pop %v1057
    %v1059 = vmul.f32 %v1054, 1.442695
    %v1060 = vpow.pop %v1059
    %v1061 = vmul.f32 %v1055, 1.442695
    %v1062 = vpow.pop %v1061
    %v1063 = vmul.f32 %v1056, 1.442695
    %v1064 = vpow.pop %v1063
    %v1065 = vsel %vm1042, %v1058, 0.0
    %v1066 = vsel %vm1042, %v1060, 0.0
    %v1067 = vadd.f32 %v1065, %v1066
    %1068 = vadd.xlane.f32.xlu0 %v1067
    %v1069 = vpop.xlane.xlu0 %1068
    %v1070 = vsel %vm1042, %v1062, 0.0
    %v1071 = vsel %vm1042, %v1064, 0.0
    %v1072 = vadd.f32 %v1070, %v1071
    %1073 = vadd.xlane.f32.xlu0 %v1072
    %v1074 = vpop.xlane.xlu0 %1073
    %v1075 = vrcp.pop %v1069
    %v1076 = vrcp.pop %v1074
    %v1077 = vmul.f32 %v1058, %v1075
    %v1078 = vmul.f32 %v1060, %v1075
    %v1079 = vmul.f32 %v1062, %v1076
    %v1080 = vmul.f32 %v1064, %v1076
    %v1082 = vcombine.high %v46, %v46
    %v1084 = vand.u32 %v1082, 4294901760
    %1085 = vmatprep.subr.mxu0 %v1084
    %v1086 = vand.u32 %v46, 4294901760
    %1087 = vmatpush1.xpose.msra.mxu0 %v1086
    %1088 = vmatprep.subr.mxu0 0.0
    %1089 = vmatpush1.xpose.msra.mxu0 0.0
    %1090 = vmatprep.subr.mxu0 0.0
    %1091 = vmatpush1.xpose.msra.mxu0 0.0
    %1092 = vmatprep.subr.mxu0 0.0
    %1093 = vmatpush1.xpose.msra.mxu0 0.0
    %1094 = vmatprep.subr.mxu0 0.0
    %1095 = vmatpush1.xpose.msra.mxu0 0.0
    %1096 = vmatprep.subr.mxu0 0.0
    %1097 = vmatpush1.xpose.msra.mxu0 0.0
    %1098 = vmatprep.subr.mxu0 0.0
    %1099 = vmatpush1.xpose.msra.mxu0 0.0
    %1100 = vmatprep.subr.mxu0 0.0
    %1101 = vmatpush1.xpose.msra.mxu0 0.0
    %1102 = vmatprep.subr.mxu0 0.0
    %1103 = vmatpush1.xpose.msra.mxu0 0.0
    %1104 = vmatprep.subr.mxu0 0.0
    %1105 = vmatpush1.xpose.msra.mxu0 0.0
    %1106 = vmatprep.subr.mxu0 0.0
    %1107 = vmatpush1.xpose.msra.mxu0 0.0
    %1108 = vmatprep.subr.mxu0 0.0
    %1109 = vmatpush1.xpose.msra.mxu0 0.0
    %1110 = vmatprep.subr.mxu0 0.0
    %1111 = vmatpush1.xpose.msra.mxu0 0.0
    %1112 = vmatprep.subr.mxu0 0.0
    %1113 = vmatpush1.xpose.msra.mxu0 0.0
    %1114 = vmatprep.subr.mxu0 0.0
    %1115 = vmatpush1.xpose.msra.mxu0 0.0
    %1116 = vmatprep.subr.mxu0 0.0
    %1117 = vmatpush1.xpose.msra.mxu0 0.0
    %1118 = vmatprep.subr.mxu0 0.0
    %1119 = vmatpush1.xpose.msra.mxu0 0.0
    %1120 = vmatprep.subr.mxu0 0.0
    %1121 = vmatpush1.xpose.msra.mxu0 0.0
    %1122 = vmatprep.subr.mxu0 0.0
    %1123 = vmatpush1.xpose.msra.mxu0 0.0
    %1124 = vmatprep.subr.mxu0 0.0
    %1125 = vmatpush1.xpose.msra.mxu0 0.0
    %1126 = vmatprep.subr.mxu0 0.0
    %1127 = vmatpush1.xpose.msra.mxu0 0.0
    %1128 = vmatprep.subr.mxu0 0.0
    %1129 = vmatpush1.xpose.msra.mxu0 0.0
    %1130 = vmatprep.subr.mxu0 0.0
    %1131 = vmatpush1.xpose.msra.mxu0 0.0
    %1132 = vmatprep.subr.mxu0 0.0
    %1133 = vmatpush1.xpose.msra.mxu0 0.0
    %1134 = vmatprep.subr.mxu0 0.0
    %1135 = vmatpush1.xpose.msra.mxu0 0.0
    %1136 = vmatprep.subr.mxu0 0.0
    %1137 = vmatpush1.xpose.msra.mxu0 0.0
    %1138 = vmatprep.subr.mxu0 0.0
    %1139 = vmatpush1.xpose.msra.mxu0 0.0
    %1140 = vmatprep.subr.mxu0 0.0
    %1141 = vmatpush1.xpose.msra.mxu0 0.0
    %1142 = vmatprep.subr.mxu0 0.0
    %1143 = vmatpush1.xpose.msra.mxu0 0.0
    %1144 = vmatprep.subr.mxu0 0.0
    %1145 = vmatpush1.xpose.msra.mxu0 0.0
    %1146 = vmatprep.subr.mxu0 0.0
    %1147 = vmatpush1.xpose.msra.mxu0 0.0
    %1148 = vmatprep.subr.mxu0 0.0
    %1149 = vmatpush1.xpose.msra.mxu0 0.0
    %v1150 = vand.u32 %v1078, 4294901760
    %v1151 = vsub.f32 %v1078, %v1150
    %v1152 = vand.u32 %v1151, 4294901760
    %v1153 = vsub.f32 %v1151, %v1152
    %v1154 = vand.u32 %v1153, 4294901760
    %1155 = vmatprep.mubr.f32.mxu0 %v1154
    %v1156 = vand.u32 %v1077, 4294901760
    %v1157 = vsub.f32 %v1077, %v1156
    %v1158 = vand.u32 %v1157, 4294901760
    %v1159 = vsub.f32 %v1157, %v1158
    %v1160 = vand.u32 %v1159, 4294901760
    %1161 = vmatmul.mubr.f32.gmra.mrb[0].mxu0 %v1160
    %v1162 = vpop.f32.mrb[0].mxu0
    %v1163 = vadd.f32 0.0, %v1162
    %v1164 = vpop.f32.mrb[0].mxu0
    %1165 = vdwg.mxu0
    %v1166 = vand.u32 %v1082, 4294901760
    %v1167 = vsub.f32 %v1082, %v1166
    %v1168 = vand.u32 %v1167, 4294901760
    %v1169 = vsub.f32 %v1167, %v1168
    %v1170 = vand.u32 %v1169, 4294901760
    %1171 = vmatprep.subr.mxu0 %v1170
    %v1172 = vand.u32 %v46, 4294901760
    %v1173 = vsub.f32 %v46, %v1172
    %v1174 = vand.u32 %v1173, 4294901760
    %v1175 = vsub.f32 %v1173, %v1174
    %v1176 = vand.u32 %v1175, 4294901760
    %1177 = vmatpush1.xpose.msra.mxu0 %v1176
    %1178 = vmatprep.subr.mxu0 0.0
    %1179 = vmatpush1.xpose.msra.mxu0 0.0
    %1180 = vmatprep.subr.mxu0 0.0
    %1181 = vmatpush1.xpose.msra.mxu0 0.0
    %1182 = vmatprep.subr.mxu0 0.0
    %1183 = vmatpush1.xpose.msra.mxu0 0.0
    %1184 = vmatprep.subr.mxu0 0.0
    %1185 = vmatpush1.xpose.msra.mxu0 0.0
    %1186 = vmatprep.subr.mxu0 0.0
    %1187 = vmatpush1.xpose.msra.mxu0 0.0
    %1188 = vmatprep.subr.mxu0 0.0
    %1189 = vmatpush1.xpose.msra.mxu0 0.0
    %1190 = vmatprep.subr.mxu0 0.0
    %1191 = vmatpush1.xpose.msra.mxu0 0.0
    %1192 = vmatprep.subr.mxu0 0.0
    %1193 = vmatpush1.xpose.msra.mxu0 0.0
    %1194 = vmatprep.subr.mxu0 0.0
    %1195 = vmatpush1.xpose.msra.mxu0 0.0
    %1196 = vmatprep.subr.mxu0 0.0
    %1197 = vmatpush1.xpose.msra.mxu0 0.0
    %1198 = vmatprep.subr.mxu0 0.0
    %1199 = vmatpush1.xpose.msra.mxu0 0.0
    %1200 = vmatprep.subr.mxu0 0.0
    %1201 = vmatpush1.xpose.msra.mxu0 0.0
    %1202 = vmatprep.subr.mxu0 0.0
    %1203 = vmatpush1.xpose.msra.mxu0 0.0
    %1204 = vmatprep.subr.mxu0 0.0
    %1205 = vmatpush1.xpose.msra.mxu0 0.0
    %1206 = vmatprep.subr.mxu0 0.0
    %1207 = vmatpush1.xpose.msra.mxu0 0.0
    %1208 = vmatprep.subr.mxu0 0.0
    %1209 = vmatpush1.xpose.msra.mxu0 0.0
    %1210 = vmatprep.subr.mxu0 0.0
    %1211 = vmatpush1.xpose.msra.mxu0 0.0
    %1212 = vmatprep.subr.mxu0 0.0
    %1213 = vmatpush1.xpose.msra.mxu0 0.0
    %1214 = vmatprep.subr.mxu0 0.0
    %1215 = vmatpush1.xpose.msra.mxu0 0.0
    %1216 = vmatprep.subr.mxu0 0.0
    %1217 = vmatpush1.xpose.msra.mxu0 0.0
    %1218 = vmatprep.subr.mxu0 0.0
    %1219 = vmatpush1.xpose.msra.mxu0 0.0
    %1220 = vmatprep.subr.mxu0 0.0
    %1221 = vmatpush1.xpose.msra.mxu0 0.0
    %1222 = vmatprep.subr.mxu0 0.0
    %1223 = vmatpush1.xpose.msra.mxu0 0.0
    %1224 = vmatprep.subr.mxu0 0.0
    %1225 = vmatpush1.xpose.msra.mxu0 0.0
    %1226 = vmatprep.subr.mxu0 0.0
    %1227 = vmatpush1.xpose.msra.mxu0 0.0
    %1228 = vmatprep.subr.mxu0 0.0
    %1229 = vmatpush1.xpose.msra.mxu0 0.0
    %1230 = vmatprep.subr.mxu0 0.0
    %1231 = vmatpush1.xpose.msra.mxu0 0.0
    %1232 = vmatprep.subr.mxu0 0.0
    %1233 = vmatpush1.xpose.msra.mxu0 0.0
    %1234 = vmatprep.subr.mxu0 0.0
    %1235 = vmatpush1.xpose.msra.mxu0 0.0
    %1236 = vmatprep.subr.mxu0 0.0
    %1237 = vmatpush1.xpose.msra.mxu0 0.0
    %1238 = vmatprep.subr.mxu0 0.0
    %1239 = vmatpush1.xpose.msra.mxu0 0.0
    %v1240 = vand.u32 %v1078, 4294901760
    %1241 = vmatprep.mubr.f32.mxu0 %v1240
    %v1242 = vand.u32 %v1077, 4294901760
    %1243 = vmatmul.mubr.f32.gmra.mrb[0].mxu0 %v1242
    %v1244 = vpop.f32.mrb[0].mxu0
    %v1245 = vadd.f32 %v1163, %v1244
    %v1246 = vpop.f32.mrb[0].mxu0
    %1247 = vdwg.mxu0
    %v1248 = vand.u32 %v1082, 4294901760
    %v1249 = vsub.f32 %v1082, %v1248
    %1250 = vmatprep.subr.mxu0 %v1249
    %v1251 = vand.u32 %v46, 4294901760
    %v1252 = vsub.f32 %v46, %v1251
    %1253 = vmatpush1.xpose.msra.mxu0 %v1252
    %1254 = vmatprep.subr.mxu0 0.0
    %1255 = vmatpush1.xpose.msra.mxu0 0.0
    %1256 = vmatprep.subr.mxu0 0.0
    %1257 = vmatpush1.xpose.msra.mxu0 0.0
    %1258 = vmatprep.subr.mxu0 0.0
    %1259 = vmatpush1.xpose.msra.mxu0 0.0
    %1260 = vmatprep.subr.mxu0 0.0
    %1261 = vmatpush1.xpose.msra.mxu0 0.0
    %1262 = vmatprep.subr.mxu0 0.0
    %1263 = vmatpush1.xpose.msra.mxu0 0.0
    %1264 = vmatprep.subr.mxu0 0.0
    %1265 = vmatpush1.xpose.msra.mxu0 0.0
    %1266 = vmatprep.subr.mxu0 0.0
    %1267 = vmatpush1.xpose.msra.mxu0 0.0
    %1268 = vmatprep.subr.mxu0 0.0
    %1269 = vmatpush1.xpose.msra.mxu0 0.0
    %1270 = vmatprep.subr.mxu0 0.0
    %1271 = vmatpush1.xpose.msra.mxu0 0.0
    %1272 = vmatprep.subr.mxu0 0.0
    %1273 = vmatpush1.xpose.msra.mxu0 0.0
    %1274 = vmatprep.subr.mxu0 0.0
    %1275 = vmatpush1.xpose.msra.mxu0 0.0
    %1276 = vmatprep.subr.mxu0 0.0
    %1277 = vmatpush1.xpose.msra.mxu0 0.0
    %1278 = vmatprep.subr.mxu0 0.0
    %1279 = vmatpush1.xpose.msra.mxu0 0.0
    %1280 = vmatprep.subr.mxu0 0.0
    %1281 = vmatpush1.xpose.msra.mxu0 0.0
    %1282 = vmatprep.subr.mxu0 0.0
    %1283 = vmatpush1.xpose.msra.mxu0 0.0
    %1284 = vmatprep.subr.mxu0 0.0
    %1285 = vmatpush1.xpose.msra.mxu0 0.0
    %1286 = vmatprep.subr.mxu0 0.0
    %1287 = vmatpush1.xpose.msra.mxu0 0.0
    %1288 = vmatprep.subr.mxu0 0.0
    %1289 = vmatpush1.xpose.msra.mxu0 0.0
    %1290 = vmatprep.subr.mxu0 0.0
    %1291 = vmatpush1.xpose.msra.mxu0 0.0
    %1292 = vmatprep.subr.mxu0 0.0
    %1293 = vmatpush1.xpose.msra.mxu0 0.0
    %1294 = vmatprep.subr.mxu0 0.0
    %1295 = vmatpush1.xpose.msra.mxu0 0.0
    %1296 = vmatprep.subr.mxu0 0.0
    %1297 = vmatpush1.xpose.msra.mxu0 0.0
    %1298 = vmatprep.subr.mxu0 0.0
    %1299 = vmatpush1.xpose.msra.mxu0 0.0
    %1300 = vmatprep.subr.mxu0 0.0
    %1301 = vmatpush1.xpose.msra.mxu0 0.0
    %1302 = vmatprep.subr.mxu0 0.0
    %1303 = vmatpush1.xpose.msra.mxu0 0.0
    %1304 = vmatprep.subr.mxu0 0.0
    %1305 = vmatpush1.xpose.msra.mxu0 0.0
    %1306 = vmatprep.subr.mxu0 0.0
    %1307 = vmatpush1.xpose.msra.mxu0 0.0
    %1308 = vmatprep.subr.mxu0 0.0
    %1309 = vmatpush1.xpose.msra.mxu0 0.0
    %1310 = vmatprep.subr.mxu0 0.0
    %1311 = vmatpush1.xpose.msra.mxu0 0.0
    %1312 = vmatprep.subr.mxu0 0.0
    %1313 = vmatpush1.xpose.msra.mxu0 0.0
    %1314 = vmatprep.subr.mxu0 0.0
    %1315 = vmatpush1.xpose.msra.mxu0 0.0
    %v1316 = vand.u32 %v1078, 4294901760
    %v1317 = vsub.f32 %v1078, %v1316
    %1318 = vmatprep.mubr.f32.mxu0 %v1317
    %v1319 = vand.u32 %v1077, 4294901760
    %v1320 = vsub.f32 %v1077, %v1319
    %1321 = vmatmul.mubr.f32.gmra.mrb[0].mxu0 %v1320
    %v1322 = vpop.f32.mrb[0].mxu0
    %v1323 = vadd.f32 %v1245, %v1322
    %v1324 = vpop.f32.mrb[0].mxu0
    %1325 = vdwg.mxu0
    %v1326 = vand.u32 %v1082, 4294901760
    %1327 = vmatprep.subr.mxu0 %v1326
    %v1328 = vand.u32 %v46, 4294901760
    %1329 = vmatpush1.xpose.msra.mxu0 %v1328
    %1330 = vmatprep.subr.mxu0 0.0
    %1331 = vmatpush1.xpose.msra.mxu0 0.0
    %1332 = vmatprep.subr.mxu0 0.0
    %1333 = vmatpush1.xpose.msra.mxu0 0.0
    %1334 = vmatprep.subr.mxu0 0.0
    %1335 = vmatpush1.xpose.msra.mxu0 0.0
    %1336 = vmatprep.subr.mxu0 0.0
    %1337 = vmatpush1.xpose.msra.mxu0 0.0
    %1338 = vmatprep.subr.mxu0 0.0
    %1339 = vmatpush1.xpose.msra.mxu0 0.0
    %1340 = vmatprep.subr.mxu0 0.0
    %1341 = vmatpush1.xpose.msra.mxu0 0.0
    %1342 = vmatprep.subr.mxu0 0.0
    %1343 = vmatpush1.xpose.msra.mxu0 0.0
    %1344 = vmatprep.subr.mxu0 0.0
    %1345 = vmatpush1.xpose.msra.mxu0 0.0
    %1346 = vmatprep.subr.mxu0 0.0
    %1347 = vmatpush1.xpose.msra.mxu0 0.0
    %1348 = vmatprep.subr.mxu0 0.0
    %1349 = vmatpush1.xpose.msra.mxu0 0.0
    %1350 = vmatprep.subr.mxu0 0.0
    %1351 = vmatpush1.xpose.msra.mxu0 0.0
    %1352 = vmatprep.subr.mxu0 0.0
    %1353 = vmatpush1.xpose.msra.mxu0 0.0
    %1354 = vmatprep.subr.mxu0 0.0
    %1355 = vmatpush1.xpose.msra.mxu0 0.0
    %1356 = vmatprep.subr.mxu0 0.0
    %1357 = vmatpush1.xpose.msra.mxu0 0.0
    %1358 = vmatprep.subr.mxu0 0.0
    %1359 = vmatpush1.xpose.msra.mxu0 0.0
    %1360 = vmatprep.subr.mxu0 0.0
    %1361 = vmatpush1.xpose.msra.mxu0 0.0
    %1362 = vmatprep.subr.mxu0 0.0
    %1363 = vmatpush1.xpose.msra.mxu0 0.0
    %1364 = vmatprep.subr.mxu0 0.0
    %1365 = vmatpush1.xpose.msra.mxu0 0.0
    %1366 = vmatprep.subr.mxu0 0.0
    %1367 = vmatpush1.xpose.msra.mxu0 0.0
    %1368 = vmatprep.subr.mxu0 0.0
    %1369 = vmatpush1.xpose.msra.mxu0 0.0
    %1370 = vmatprep.subr.mxu0 0.0
    %1371 = vmatpush1.xpose.msra.mxu0 0.0
    %1372 = vmatprep.subr.mxu0 0.0
    %1373 = vmatpush1.xpose.msra.mxu0 0.0
    %1374 = vmatprep.subr.mxu0 0.0
    %1375 = vmatpush1.xpose.msra.mxu0 0.0
    %1376 = vmatprep.subr.mxu0 0.0
    %1377 = vmatpush1.xpose.msra.mxu0 0.0
    %1378 = vmatprep.subr.mxu0 0.0
    %1379 = vmatpush1.xpose.msra.mxu0 0.0
    %1380 = vmatprep.subr.mxu0 0.0
    %1381 = vmatpush1.xpose.msra.mxu0 0.0
    %1382 = vmatprep.subr.mxu0 0.0
    %1383 = vmatpush1.xpose.msra.mxu0 0.0
    %1384 = vmatprep.subr.mxu0 0.0
    %1385 = vmatpush1.xpose.msra.mxu0 0.0
    %1386 = vmatprep.subr.mxu0 0.0
    %1387 = vmatpush1.xpose.msra.mxu0 0.0
    %1388 = vmatprep.subr.mxu0 0.0
    %1389 = vmatpush1.xpose.msra.mxu0 0.0
    %1390 = vmatprep.subr.mxu0 0.0
    %1391 = vmatpush1.xpose.msra.mxu0 0.0
    %v1392 = vand.u32 %v1078, 4294901760
    %v1393 = vsub.f32 %v1078, %v1392
    %v1394 = vand.u32 %v1393, 4294901760
    %1395 = vmatprep.mubr.f32.mxu0 %v1394
    %v1396 = vand.u32 %v1077, 4294901760
    %v1397 = vsub.f32 %v1077, %v1396
    %v1398 = vand.u32 %v1397, 4294901760
    %1399 = vmatmul.mubr.f32.gmra.mrb[0].mxu0 %v1398
    %v1400 = vpop.f32.mrb[0].mxu0
    %v1401 = vadd.f32 %v1323, %v1400
    %v1402 = vpop.f32.mrb[0].mxu0
    %1403 = vdwg.mxu0
    %v1404 = vand.u32 %v1082, 4294901760
    %v1405 = vsub.f32 %v1082, %v1404
    %v1406 = vand.u32 %v1405, 4294901760
    %1407 = vmatprep.subr.mxu0 %v1406
    %v1408 = vand.u32 %v46, 4294901760
    %v1409 = vsub.f32 %v46, %v1408
    %v1410 = vand.u32 %v1409, 4294901760
    %1411 = vmatpush1.xpose.msra.mxu0 %v1410
    %1412 = vmatprep.subr.mxu0 0.0
    %1413 = vmatpush1.xpose.msra.mxu0 0.0
    %1414 = vmatprep.subr.mxu0 0.0
    %1415 = vmatpush1.xpose.msra.mxu0 0.0
    %1416 = vmatprep.subr.mxu0 0.0
    %1417 = vmatpush1.xpose.msra.mxu0 0.0
    %1418 = vmatprep.subr.mxu0 0.0
    %1419 = vmatpush1.xpose.msra.mxu0 0.0
    %1420 = vmatprep.subr.mxu0 0.0
    %1421 = vmatpush1.xpose.msra.mxu0 0.0
    %1422 = vmatprep.subr.mxu0 0.0
    %1423 = vmatpush1.xpose.msra.mxu0 0.0
    %1424 = vmatprep.subr.mxu0 0.0
    %1425 = vmatpush1.xpose.msra.mxu0 0.0
    %1426 = vmatprep.subr.mxu0 0.0
    %1427 = vmatpush1.xpose.msra.mxu0 0.0
    %1428 = vmatprep.subr.mxu0 0.0
    %1429 = vmatpush1.xpose.msra.mxu0 0.0
    %1430 = vmatprep.subr.mxu0 0.0
    %1431 = vmatpush1.xpose.msra.mxu0 0.0
    %1432 = vmatprep.subr.mxu0 0.0
    %1433 = vmatpush1.xpose.msra.mxu0 0.0
    %1434 = vmatprep.subr.mxu0 0.0
    %1435 = vmatpush1.xpose.msra.mxu0 0.0
    %1436 = vmatprep.subr.mxu0 0.0
    %1437 = vmatpush1.xpose.msra.mxu0 0.0
    %1438 = vmatprep.subr.mxu0 0.0
    %1439 = vmatpush1.xpose.msra.mxu0 0.0
    %1440 = vmatprep.subr.mxu0 0.0
    %1441 = vmatpush1.xpose.msra.mxu0 0.0
    %1442 = vmatprep.subr.mxu0 0.0
    %1443 = vmatpush1.xpose.msra.mxu0 0.0
    %1444 = vmatprep.subr.mxu0 0.0
    %1445 = vmatpush1.xpose.msra.mxu0 0.0
    %1446 = vmatprep.subr.mxu0 0.0
    %1447 = vmatpush1.xpose.msra.mxu0 0.0
    %1448 = vmatprep.subr.mxu0 0.0
    %1449 = vmatpush1.xpose.msra.mxu0 0.0
    %1450 = vmatprep.subr.mxu0 0.0
    %1451 = vmatpush1.xpose.msra.mxu0 0.0
    %1452 = vmatprep.subr.mxu0 0.0
    %1453 = vmatpush1.xpose.msra.mxu0 0.0
    %1454 = vmatprep.subr.mxu0 0.0
    %1455 = vmatpush1.xpose.msra.mxu0 0.0
    %1456 = vmatprep.subr.mxu0 0.0
    %1457 = vmatpush1.xpose.msra.mxu0 0.0
    %1458 = vmatprep.subr.mxu0 0.0
    %1459 = vmatpush1.xpose.msra.mxu0 0.0
    %1460 = vmatprep.subr.mxu0 0.0
    %1461 = vmatpush1.xpose.msra.mxu0 0.0
    %1462 = vmatprep.subr.mxu0 0.0
    %1463 = vmatpush1.xpose.msra.mxu0 0.0
    %1464 = vmatprep.subr.mxu0 0.0
    %1465 = vmatpush1.xpose.msra.mxu0 0.0
    %1466 = vmatprep.subr.mxu0 0.0
    %1467 = vmatpush1.xpose.msra.mxu0 0.0
    %1468 = vmatprep.subr.mxu0 0.0
    %1469 = vmatpush1.xpose.msra.mxu0 0.0
    %1470 = vmatprep.subr.mxu0 0.0
    %1471 = vmatpush1.xpose.msra.mxu0 0.0
    %1472 = vmatprep.subr.mxu0 0.0
    %1473 = vmatpush1.xpose.msra.mxu0 0.0
    %v1474 = vand.u32 %v1078, 4294901760
    %1475 = vmatprep.mubr.f32.mxu0 %v1474
    %v1476 = vand.u32 %v1077, 4294901760
    %1477 = vmatmul.mubr.f32.gmra.mrb[0].mxu0 %v1476
    %v1478 = vpop.f32.mrb[0].mxu0
    %v1479 = vadd.f32 %v1401, %v1478
    %v1480 = vpop.f32.mrb[0].mxu0
    %1481 = vdwg.mxu0
    %v1482 = vand.u32 %v1082, 4294901760
    %1483 = vmatprep.subr.mxu0 %v1482
    %v1484 = vand.u32 %v46, 4294901760
    %1485 = vmatpush1.xpose.msra.mxu0 %v1484
    %1486 = vmatprep.subr.mxu0 0.0
    %1487 = vmatpush1.xpose.msra.mxu0 0.0
    %1488 = vmatprep.subr.mxu0 0.0
    %1489 = vmatpush1.xpose.msra.mxu0 0.0
    %1490 = vmatprep.subr.mxu0 0.0
    %1491 = vmatpush1.xpose.msra.mxu0 0.0
    %1492 = vmatprep.subr.mxu0 0.0
    %1493 = vmatpush1.xpose.msra.mxu0 0.0
    %1494 = vmatprep.subr.mxu0 0.0
    %1495 = vmatpush1.xpose.msra.mxu0 0.0
    %1496 = vmatprep.subr.mxu0 0.0
    %1497 = vmatpush1.xpose.msra.mxu0 0.0
    %1498 = vmatprep.subr.mxu0 0.0
    %1499 = vmatpush1.xpose.msra.mxu0 0.0
    %1500 = vmatprep.subr.mxu0 0.0
    %1501 = vmatpush1.xpose.msra.mxu0 0.0
    %1502 = vmatprep.subr.mxu0 0.0
    %1503 = vmatpush1.xpose.msra.mxu0 0.0
    %1504 = vmatprep.subr.mxu0 0.0
    %1505 = vmatpush1.xpose.msra.mxu0 0.0
    %1506 = vmatprep.subr.mxu0 0.0
    %1507 = vmatpush1.xpose.msra.mxu0 0.0
    %1508 = vmatprep.subr.mxu0 0.0
    %1509 = vmatpush1.xpose.msra.mxu0 0.0
    %1510 = vmatprep.subr.mxu0 0.0
    %1511 = vmatpush1.xpose.msra.mxu0 0.0
    %1512 = vmatprep.subr.mxu0 0.0
    %1513 = vmatpush1.xpose.msra.mxu0 0.0
    %1514 = vmatprep.subr.mxu0 0.0
    %1515 = vmatpush1.xpose.msra.mxu0 0.0
    %1516 = vmatprep.subr.mxu0 0.0
    %1517 = vmatpush1.xpose.msra.mxu0 0.0
    %1518 = vmatprep.subr.mxu0 0.0
    %1519 = vmatpush1.xpose.msra.mxu0 0.0
    %1520 = vmatprep.subr.mxu0 0.0
    %1521 = vmatpush1.xpose.msra.mxu0 0.0
    %1522 = vmatprep.subr.mxu0 0.0
    %1523 = vmatpush1.xpose.msra.mxu0 0.0
    %1524 = vmatprep.subr.mxu0 0.0
    %1525 = vmatpush1.xpose.msra.mxu0 0.0
    %1526 = vmatprep.subr.mxu0 0.0
    %1527 = vmatpush1.xpose.msra.mxu0 0.0
    %1528 = vmatprep.subr.mxu0 0.0
    %1529 = vmatpush1.xpose.msra.mxu0 0.0
    %1530 = vmatprep.subr.mxu0 0.0
    %1531 = vmatpush1.xpose.msra.mxu0 0.0
    %1532 = vmatprep.subr.mxu0 0.0
    %1533 = vmatpush1.xpose.msra.mxu0 0.0
    %1534 = vmatprep.subr.mxu0 0.0
    %1535 = vmatpush1.xpose.msra.mxu0 0.0
    %1536 = vmatprep.subr.mxu0 0.0
    %1537 = vmatpush1.xpose.msra.mxu0 0.0
    %1538 = vmatprep.subr.mxu0 0.0
    %1539 = vmatpush1.xpose.msra.mxu0 0.0
    %1540 = vmatprep.subr.mxu0 0.0
    %1541 = vmatpush1.xpose.msra.mxu0 0.0
    %1542 = vmatprep.subr.mxu0 0.0
    %1543 = vmatpush1.xpose.msra.mxu0 0.0
    %1544 = vmatprep.subr.mxu0 0.0
    %1545 = vmatpush1.xpose.msra.mxu0 0.0
    %1546 = vmatprep.subr.mxu0 0.0
    %1547 = vmatpush1.xpose.msra.mxu0 0.0
    %v1548 = vand.u32 %v1078, 4294901760
    %1549 = vmatprep.mubr.f32.mxu0 %v1548
    %v1550 = vand.u32 %v1077, 4294901760
    %1551 = vmatmul.mubr.f32.gmra.mrb[0].mxu0 %v1550
    %v1552 = vpop.f32.mrb[0].mxu0
    %v1553 = vadd.f32 %v1479, %v1552
    %v1554 = vpop.f32.mrb[0].mxu0
    %1555 = vdwg.mxu0
    %v1557 = vcombine.high %v47, %v47
    %v1559 = vand.u32 %v1557, 4294901760
    %1560 = vmatprep.subr.mxu0 %v1559
    %v1561 = vand.u32 %v47, 4294901760
    %1562 = vmatpush1.xpose.msra.mxu0 %v1561
    %1563 = vmatprep.subr.mxu0 0.0
    %1564 = vmatpush1.xpose.msra.mxu0 0.0
    %1565 = vmatprep.subr.mxu0 0.0
    %1566 = vmatpush1.xpose.msra.mxu0 0.0
    %1567 = vmatprep.subr.mxu0 0.0
    %1568 = vmatpush1.xpose.msra.mxu0 0.0
    %1569 = vmatprep.subr.mxu0 0.0
    %1570 = vmatpush1.xpose.msra.mxu0 0.0
    %1571 = vmatprep.subr.mxu0 0.0
    %1572 = vmatpush1.xpose.msra.mxu0 0.0
    %1573 = vmatprep.subr.mxu0 0.0
    %1574 = vmatpush1.xpose.msra.mxu0 0.0
    %1575 = vmatprep.subr.mxu0 0.0
    %1576 = vmatpush1.xpose.msra.mxu0 0.0
    %1577 = vmatprep.subr.mxu0 0.0
    %1578 = vmatpush1.xpose.msra.mxu0 0.0
    %1579 = vmatprep.subr.mxu0 0.0
    %1580 = vmatpush1.xpose.msra.mxu0 0.0
    %1581 = vmatprep.subr.mxu0 0.0
    %1582 = vmatpush1.xpose.msra.mxu0 0.0
    %1583 = vmatprep.subr.mxu0 0.0
    %1584 = vmatpush1.xpose.msra.mxu0 0.0
    %1585 = vmatprep.subr.mxu0 0.0
    %1586 = vmatpush1.xpose.msra.mxu0 0.0
    %1587 = vmatprep.subr.mxu0 0.0
    %1588 = vmatpush1.xpose.msra.mxu0 0.0
    %1589 = vmatprep.subr.mxu0 0.0
    %1590 = vmatpush1.xpose.msra.mxu0 0.0
    %1591 = vmatprep.subr.mxu0 0.0
    %1592 = vmatpush1.xpose.msra.mxu0 0.0
    %1593 = vmatprep.subr.mxu0 0.0
    %1594 = vmatpush1.xpose.msra.mxu0 0.0
    %1595 = vmatprep.subr.mxu0 0.0
    %1596 = vmatpush1.xpose.msra.mxu0 0.0
    %1597 = vmatprep.subr.mxu0 0.0
    %1598 = vmatpush1.xpose.msra.mxu0 0.0
    %1599 = vmatprep.subr.mxu0 0.0
    %1600 = vmatpush1.xpose.msra.mxu0 0.0
    %1601 = vmatprep.subr.mxu0 0.0
    %1602 = vmatpush1.xpose.msra.mxu0 0.0
    %1603 = vmatprep.subr.mxu0 0.0
    %1604 = vmatpush1.xpose.msra.mxu0 0.0
    %1605 = vmatprep.subr.mxu0 0.0
    %1606 = vmatpush1.xpose.msra.mxu0 0.0
    %1607 = vmatprep.subr.mxu0 0.0
    %1608 = vmatpush1.xpose.msra.mxu0 0.0
    %1609 = vmatprep.subr.mxu0 0.0
    %1610 = vmatpush1.xpose.msra.mxu0 0.0
    %1611 = vmatprep.subr.mxu0 0.0
    %1612 = vmatpush1.xpose.msra.mxu0 0.0
    %1613 = vmatprep.subr.mxu0 0.0
    %1614 = vmatpush1.xpose.msra.mxu0 0.0
    %1615 = vmatprep.subr.mxu0 0.0
    %1616 = vmatpush1.xpose.msra.mxu0 0.0
    %1617 = vmatprep.subr.mxu0 0.0
    %1618 = vmatpush1.xpose.msra.mxu0 0.0
    %1619 = vmatprep.subr.mxu0 0.0
    %1620 = vmatpush1.xpose.msra.mxu0 0.0
    %1621 = vmatprep.subr.mxu0 0.0
    %1622 = vmatpush1.xpose.msra.mxu0 0.0
    %1623 = vmatprep.subr.mxu0 0.0
    %1624 = vmatpush1.xpose.msra.mxu0 0.0
    %v1625 = vand.u32 %v1080, 4294901760
    %v1626 = vsub.f32 %v1080, %v1625
    %v1627 = vand.u32 %v1626, 4294901760
    %v1628 = vsub.f32 %v1626, %v1627
    %v1629 = vand.u32 %v1628, 4294901760
    %1630 = vmatprep.mubr.f32.mxu0 %v1629
    %v1631 = vand.u32 %v1079, 4294901760
    %v1632 = vsub.f32 %v1079, %v1631
    %v1633 = vand.u32 %v1632, 4294901760
    %v1634 = vsub.f32 %v1632, %v1633
    %v1635 = vand.u32 %v1634, 4294901760
    %1636 = vmatmul.mubr.f32.gmra.mrb[0].mxu0 %v1635
    %v1637 = vpop.f32.mrb[0].mxu0
    %v1638 = vadd.f32 0.0, %v1637
    %v1639 = vpop.f32.mrb[0].mxu0
    %1640 = vdwg.mxu0
    %v1641 = vand.u32 %v1557, 4294901760
    %v1642 = vsub.f32 %v1557, %v1641
    %v1643 = vand.u32 %v1642, 4294901760
    %v1644 = vsub.f32 %v1642, %v1643
    %v1645 = vand.u32 %v1644, 4294901760
    %1646 = vmatprep.subr.mxu0 %v1645
    %v1647 = vand.u32 %v47, 4294901760
    %v1648 = vsub.f32 %v47, %v1647
    %v1649 = vand.u32 %v1648, 4294901760
    %v1650 = vsub.f32 %v1648, %v1649
    %v1651 = vand.u32 %v1650, 4294901760
    %1652 = vmatpush1.xpose.msra.mxu0 %v1651
    %1653 = vmatprep.subr.mxu0 0.0
    %1654 = vmatpush1.xpose.msra.mxu0 0.0
    %1655 = vmatprep.subr.mxu0 0.0
    %1656 = vmatpush1.xpose.msra.mxu0 0.0
    %1657 = vmatprep.subr.mxu0 0.0
    %1658 = vmatpush1.xpose.msra.mxu0 0.0
    %1659 = vmatprep.subr.mxu0 0.0
    %1660 = vmatpush1.xpose.msra.mxu0 0.0
    %1661 = vmatprep.subr.mxu0 0.0
    %1662 = vmatpush1.xpose.msra.mxu0 0.0
    %1663 = vmatprep.subr.mxu0 0.0
    %1664 = vmatpush1.xpose.msra.mxu0 0.0
    %1665 = vmatprep.subr.mxu0 0.0
    %1666 = vmatpush1.xpose.msra.mxu0 0.0
    %1667 = vmatprep.subr.mxu0 0.0
    %1668 = vmatpush1.xpose.msra.mxu0 0.0
    %1669 = vmatprep.subr.mxu0 0.0
    %1670 = vmatpush1.xpose.msra.mxu0 0.0
    %1671 = vmatprep.subr.mxu0 0.0
    %1672 = vmatpush1.xpose.msra.mxu0 0.0
    %1673 = vmatprep.subr.mxu0 0.0
    %1674 = vmatpush1.xpose.msra.mxu0 0.0
    %1675 = vmatprep.subr.mxu0 0.0
    %1676 = vmatpush1.xpose.msra.mxu0 0.0
    %1677 = vmatprep.subr.mxu0 0.0
    %1678 = vmatpush1.xpose.msra.mxu0 0.0
    %1679 = vmatprep.subr.mxu0 0.0
    %1680 = vmatpush1.xpose.msra.mxu0 0.0
    %1681 = vmatprep.subr.mxu0 0.0
    %1682 = vmatpush1.xpose.msra.mxu0 0.0
    %1683 = vmatprep.subr.mxu0 0.0
    %1684 = vmatpush1.xpose.msra.mxu0 0.0
    %1685 = vmatprep.subr.mxu0 0.0
    %1686 = vmatpush1.xpose.msra.mxu0 0.0
    %1687 = vmatprep.subr.mxu0 0.0
    %1688 = vmatpush1.xpose.msra.mxu0 0.0
    %1689 = vmatprep.subr.mxu0 0.0
    %1690 = vmatpush1.xpose.msra.mxu0 0.0
    %1691 = vmatprep.subr.mxu0 0.0
    %1692 = vmatpush1.xpose.msra.mxu0 0.0
    %1693 = vmatprep.subr.mxu0 0.0
    %1694 = vmatpush1.xpose.msra.mxu0 0.0
    %1695 = vmatprep.subr.mxu0 0.0
    %1696 = vmatpush1.xpose.msra.mxu0 0.0
    %1697 = vmatprep.subr.mxu0 0.0
    %1698 = vmatpush1.xpose.msra.mxu0 0.0
    %1699 = vmatprep.subr.mxu0 0.0
    %1700 = vmatpush1.xpose.msra.mxu0 0.0
    %1701 = vmatprep.subr.mxu0 0.0
    %1702 = vmatpush1.xpose.msra.mxu0 0.0
    %1703 = vmatprep.subr.mxu0 0.0
    %1704 = vmatpush1.xpose.msra.mxu0 0.0
    %1705 = vmatprep.subr.mxu0 0.0
    %1706 = vmatpush1.xpose.msra.mxu0 0.0
    %1707 = vmatprep.subr.mxu0 0.0
    %1708 = vmatpush1.xpose.msra.mxu0 0.0
    %1709 = vmatprep.subr.mxu0 0.0
    %1710 = vmatpush1.xpose.msra.mxu0 0.0
    %1711 = vmatprep.subr.mxu0 0.0
    %1712 = vmatpush1.xpose.msra.mxu0 0.0
    %1713 = vmatprep.subr.mxu0 0.0
    %1714 = vmatpush1.xpose.msra.mxu0 0.0
    %v1715 = vand.u32 %v1080, 4294901760
    %1716 = vmatprep.mubr.f32.mxu0 %v1715
    %v1717 = vand.u32 %v1079, 4294901760
    %1718 = vmatmul.mubr.f32.gmra.mrb[0].mxu0 %v1717
    %v1719 = vpop.f32.mrb[0].mxu0
    %v1720 = vadd.f32 %v1638, %v1719
    %v1721 = vpop.f32.mrb[0].mxu0
    %1722 = vdwg.mxu0
    %v1723 = vand.u32 %v1557, 4294901760
    %v1724 = vsub.f32 %v1557, %v1723
    %1725 = vmatprep.subr.mxu0 %v1724
    %v1726 = vand.u32 %v47, 4294901760
    %v1727 = vsub.f32 %v47, %v1726
    %1728 = vmatpush1.xpose.msra.mxu0 %v1727
    %1729 = vmatprep.subr.mxu0 0.0
    %1730 = vmatpush1.xpose.msra.mxu0 0.0
    %1731 = vmatprep.subr.mxu0 0.0
    %1732 = vmatpush1.xpose.msra.mxu0 0.0
    %1733 = vmatprep.subr.mxu0 0.0
    %1734 = vmatpush1.xpose.msra.mxu0 0.0
    %1735 = vmatprep.subr.mxu0 0.0
    %1736 = vmatpush1.xpose.msra.mxu0 0.0
    %1737 = vmatprep.subr.mxu0 0.0
    %1738 = vmatpush1.xpose.msra.mxu0 0.0
    %1739 = vmatprep.subr.mxu0 0.0
    %1740 = vmatpush1.xpose.msra.mxu0 0.0
    %1741 = vmatprep.subr.mxu0 0.0
    %1742 = vmatpush1.xpose.msra.mxu0 0.0
    %1743 = vmatprep.subr.mxu0 0.0
    %1744 = vmatpush1.xpose.msra.mxu0 0.0
    %1745 = vmatprep.subr.mxu0 0.0
    %1746 = vmatpush1.xpose.msra.mxu0 0.0
    %1747 = vmatprep.subr.mxu0 0.0
    %1748 = vmatpush1.xpose.msra.mxu0 0.0
    %1749 = vmatprep.subr.mxu0 0.0
    %1750 = vmatpush1.xpose.msra.mxu0 0.0
    %1751 = vmatprep.subr.mxu0 0.0
    %1752 = vmatpush1.xpose.msra.mxu0 0.0
    %1753 = vmatprep.subr.mxu0 0.0
    %1754 = vmatpush1.xpose.msra.mxu0 0.0
    %1755 = vmatprep.subr.mxu0 0.0
    %1756 = vmatpush1.xpose.msra.mxu0 0.0
    %1757 = vmatprep.subr.mxu0 0.0
    %1758 = vmatpush1.xpose.msra.mxu0 0.0
    %1759 = vmatprep.subr.mxu0 0.0
    %1760 = vmatpush1.xpose.msra.mxu0 0.0
    %1761 = vmatprep.subr.mxu0 0.0
    %1762 = vmatpush1.xpose.msra.mxu0 0.0
    %1763 = vmatprep.subr.mxu0 0.0
    %1764 = vmatpush1.xpose.msra.mxu0 0.0
    %1765 = vmatprep.subr.mxu0 0.0
    %1766 = vmatpush1.xpose.msra.mxu0 0.0
    %1767 = vmatprep.subr.mxu0 0.0
    %1768 = vmatpush1.xpose.msra.mxu0 0.0
    %1769 = vmatprep.subr.mxu0 0.0
    %1770 = vmatpush1.xpose.msra.mxu0 0.0
    %1771 = vmatprep.subr.mxu0 0.0
    %1772 = vmatpush1.xpose.msra.mxu0 0.0
    %1773 = vmatprep.subr.mxu0 0.0
    %1774 = vmatpush1.xpose.msra.mxu0 0.0
    %1775 = vmatprep.subr.mxu0 0.0
    %1776 = vmatpush1.xpose.msra.mxu0 0.0
    %1777 = vmatprep.subr.mxu0 0.0
    %1778 = vmatpush1.xpose.msra.mxu0 0.0
    %1779 = vmatprep.subr.mxu0 0.0
    %1780 = vmatpush1.xpose.msra.mxu0 0.0
    %1781 = vmatprep.subr.mxu0 0.0
    %1782 = vmatpush1.xpose.msra.mxu0 0.0
    %1783 = vmatprep.subr.mxu0 0.0
    %1784 = vmatpush1.xpose.msra.mxu0 0.0
    %1785 = vmatprep.subr.mxu0 0.0
    %1786 = vmatpush1.xpose.msra.mxu0 0.0
    %1787 = vmatprep.subr.mxu0 0.0
    %1788 = vmatpush1.xpose.msra.mxu0 0.0
    %1789 = vmatprep.subr.mxu0 0.0
    %1790 = vmatpush1.xpose.msra.mxu0 0.0
    %v1791 = vand.u32 %v1080, 4294901760
    %v1792 = vsub.f32 %v1080, %v1791
    %1793 = vmatprep.mubr.f32.mxu0 %v1792
    %v1794 = vand.u32 %v1079, 4294901760
    %v1795 = vsub.f32 %v1079, %v1794
    %1796 = vmatmul.mubr.f32.gmra.mrb[0].mxu0 %v1795
    %v1797 = vpop.f32.mrb[0].mxu0
    %v1798 = vadd.f32 %v1720, %v1797
    %v1799 = vpop.f32.mrb[0].mxu0
    %1800 = vdwg.mxu0
    %v1801 = vand.u32 %v1557, 4294901760
    %1802 = vmatprep.subr.mxu0 %v1801
    %v1803 = vand.u32 %v47, 4294901760
    %1804 = vmatpush1.xpose.msra.mxu0 %v1803
    %1805 = vmatprep.subr.mxu0 0.0
    %1806 = vmatpush1.xpose.msra.mxu0 0.0
    %1807 = vmatprep.subr.mxu0 0.0
    %1808 = vmatpush1.xpose.msra.mxu0 0.0
    %1809 = vmatprep.subr.mxu0 0.0
    %1810 = vmatpush1.xpose.msra.mxu0 0.0
    %1811 = vmatprep.subr.mxu0 0.0
    %1812 = vmatpush1.xpose.msra.mxu0 0.0
    %1813 = vmatprep.subr.mxu0 0.0
    %1814 = vmatpush1.xpose.msra.mxu0 0.0
    %1815 = vmatprep.subr.mxu0 0.0
    %1816 = vmatpush1.xpose.msra.mxu0 0.0
    %1817 = vmatprep.subr.mxu0 0.0
    %1818 = vmatpush1.xpose.msra.mxu0 0.0
    %1819 = vmatprep.subr.mxu0 0.0
    %1820 = vmatpush1.xpose.msra.mxu0 0.0
    %1821 = vmatprep.subr.mxu0 0.0
    %1822 = vmatpush1.xpose.msra.mxu0 0.0
    %1823 = vmatprep.subr.mxu0 0.0
    %1824 = vmatpush1.xpose.msra.mxu0 0.0
    %1825 = vmatprep.subr.mxu0 0.0
    %1826 = vmatpush1.xpose.msra.mxu0 0.0
    %1827 = vmatprep.subr.mxu0 0.0
    %1828 = vmatpush1.xpose.msra.mxu0 0.0
    %1829 = vmatprep.subr.mxu0 0.0
    %1830 = vmatpush1.xpose.msra.mxu0 0.0
    %1831 = vmatprep.subr.mxu0 0.0
    %1832 = vmatpush1.xpose.msra.mxu0 0.0
    %1833 = vmatprep.subr.mxu0 0.0
    %1834 = vmatpush1.xpose.msra.mxu0 0.0
    %1835 = vmatprep.subr.mxu0 0.0
    %1836 = vmatpush1.xpose.msra.mxu0 0.0
    %1837 = vmatprep.subr.mxu0 0.0
    %1838 = vmatpush1.xpose.msra.mxu0 0.0
    %1839 = vmatprep.subr.mxu0 0.0
    %1840 = vmatpush1.xpose.msra.mxu0 0.0
    %1841 = vmatprep.subr.mxu0 0.0
    %1842 = vmatpush1.xpose.msra.mxu0 0.0
    %1843 = vmatprep.subr.mxu0 0.0
    %1844 = vmatpush1.xpose.msra.mxu0 0.0
    %1845 = vmatprep.subr.mxu0 0.0
    %1846 = vmatpush1.xpose.msra.mxu0 0.0
    %1847 = vmatprep.subr.mxu0 0.0
    %1848 = vmatpush1.xpose.msra.mxu0 0.0
    %1849 = vmatprep.subr.mxu0 0.0
    %1850 = vmatpush1.xpose.msra.mxu0 0.0
    %1851 = vmatprep.subr.mxu0 0.0
    %1852 = vmatpush1.xpose.msra.mxu0 0.0
    %1853 = vmatprep.subr.mxu0 0.0
    %1854 = vmatpush1.xpose.msra.mxu0 0.0
    %1855 = vmatprep.subr.mxu0 0.0
    %1856 = vmatpush1.xpose.msra.mxu0 0.0
    %1857 = vmatprep.subr.mxu0 0.0
    %1858 = vmatpush1.xpose.msra.mxu0 0.0
    %1859 = vmatprep.subr.mxu0 0.0
    %1860 = vmatpush1.xpose.msra.mxu0 0.0
    %1861 = vmatprep.subr.mxu0 0.0
    %1862 = vmatpush1.xpose.msra.mxu0 0.0
    %1863 = vmatprep.subr.mxu0 0.0
    %1864 = vmatpush1.xpose.msra.mxu0 0.0
    %1865 = vmatprep.subr.mxu0 0.0
    %1866 = vmatpush1.xpose.msra.mxu0 0.0
    %v1867 = vand.u32 %v1080, 4294901760
    %v1868 = vsub.f32 %v1080, %v1867
    %v1869 = vand.u32 %v1868, 4294901760
    %1870 = vmatprep.mubr.f32.mxu0 %v1869
    %v1871 = vand.u32 %v1079, 4294901760
    %v1872 = vsub.f32 %v1079, %v1871
    %v1873 = vand.u32 %v1872, 4294901760
    %1874 = vmatmul.mubr.f32.gmra.mrb[0].mxu0 %v1873
    %v1875 = vpop.f32.mrb[0].mxu0
    %v1876 = vadd.f32 %v1798, %v1875
    %v1877 = vpop.f32.mrb[0].mxu0
    %1878 = vdwg.mxu0
    %v1879 = vand.u32 %v1557, 4294901760
    %v1880 = vsub.f32 %v1557, %v1879
    %v1881 = vand.u32 %v1880, 4294901760
    %1882 = vmatprep.subr.mxu0 %v1881
    %v1883 = vand.u32 %v47, 4294901760
    %v1884 = vsub.f32 %v47, %v1883
    %v1885 = vand.u32 %v1884, 4294901760
    %1886 = vmatpush1.xpose.msra.mxu0 %v1885
    %1887 = vmatprep.subr.mxu0 0.0
    %1888 = vmatpush1.xpose.msra.mxu0 0.0
    %1889 = vmatprep.subr.mxu0 0.0
    %1890 = vmatpush1.xpose.msra.mxu0 0.0
    %1891 = vmatprep.subr.mxu0 0.0
    %1892 = vmatpush1.xpose.msra.mxu0 0.0
    %1893 = vmatprep.subr.mxu0 0.0
    %1894 = vmatpush1.xpose.msra.mxu0 0.0
    %1895 = vmatprep.subr.mxu0 0.0
    %1896 = vmatpush1.xpose.msra.mxu0 0.0
    %1897 = vmatprep.subr.mxu0 0.0
    %1898 = vmatpush1.xpose.msra.mxu0 0.0
    %1899 = vmatprep.subr.mxu0 0.0
    %1900 = vmatpush1.xpose.msra.mxu0 0.0
    %1901 = vmatprep.subr.mxu0 0.0
    %1902 = vmatpush1.xpose.msra.mxu0 0.0
    %1903 = vmatprep.subr.mxu0 0.0
    %1904 = vmatpush1.xpose.msra.mxu0 0.0
    %1905 = vmatprep.subr.mxu0 0.0
    %1906 = vmatpush1.xpose.msra.mxu0 0.0
    %1907 = vmatprep.subr.mxu0 0.0
    %1908 = vmatpush1.xpose.msra.mxu0 0.0
    %1909 = vmatprep.subr.mxu0 0.0
    %1910 = vmatpush1.xpose.msra.mxu0 0.0
    %1911 = vmatprep.subr.mxu0 0.0
    %1912 = vmatpush1.xpose.msra.mxu0 0.0
    %1913 = vmatprep.subr.mxu0 0.0
    %1914 = vmatpush1.xpose.msra.mxu0 0.0
    %1915 = vmatprep.subr.mxu0 0.0
    %1916 = vmatpush1.xpose.msra.mxu0 0.0
    %1917 = vmatprep.subr.mxu0 0.0
    %1918 = vmatpush1.xpose.msra.mxu0 0.0
    %1919 = vmatprep.subr.mxu0 0.0
    %1920 = vmatpush1.xpose.msra.mxu0 0.0
    %1921 = vmatprep.subr.mxu0 0.0
    %1922 = vmatpush1.xpose.msra.mxu0 0.0
    %1923 = vmatprep.subr.mxu0 0.0
    %1924 = vmatpush1.xpose.msra.mxu0 0.0
    %1925 = vmatprep.subr.mxu0 0.0
    %1926 = vmatpush1.xpose.msra.mxu0 0.0
    %1927 = vmatprep.subr.mxu0 0.0
    %1928 = vmatpush1.xpose.msra.mxu0 0.0
    %1929 = vmatprep.subr.mxu0 0.0
    %1930 = vmatpush1.xpose.msra.mxu0 0.0
    %1931 = vmatprep.subr.mxu0 0.0
    %1932 = vmatpush1.xpose.msra.mxu0 0.0
    %1933 = vmatprep.subr.mxu0 0.0
    %1934 = vmatpush1.xpose.msra.mxu0 0.0
    %1935 = vmatprep.subr.mxu0 0.0
    %1936 = vmatpush1.xpose.msra.mxu0 0.0
    %1937 = vmatprep.subr.mxu0 0.0
    %1938 = vmatpush1.xpose.msra.mxu0 0.0
    %1939 = vmatprep.subr.mxu0 0.0
    %1940 = vmatpush1.xpose.msra.mxu0 0.0
    %1941 = vmatprep.subr.mxu0 0.0
    %1942 = vmatpush1.xpose.msra.mxu0 0.0
    %1943 = vmatprep.subr.mxu0 0.0
    %1944 = vmatpush1.xpose.msra.mxu0 0.0
    %1945 = vmatprep.subr.mxu0 0.0
    %1946 = vmatpush1.xpose.msra.mxu0 0.0
    %1947 = vmatprep.subr.mxu0 0.0
    %1948 = vmatpush1.xpose.msra.mxu0 0.0
    %v1949 = vand.u32 %v1080, 4294901760
    %1950 = vmatprep.mubr.f32.mxu0 %v1949
    %v1951 = vand.u32 %v1079, 4294901760
    %1952 = vmatmul.mubr.f32.gmra.mrb[0].mxu0 %v1951
    %v1953 = vpop.f32.mrb[0].mxu0
    %v1954 = vadd.f32 %v1876, %v1953
    %v1955 = vpop.f32.mrb[0].mxu0
    %1956 = vdwg.mxu0
    %v1957 = vand.u32 %v1557, 4294901760
    %1958 = vmatprep.subr.mxu0 %v1957
    %v1959 = vand.u32 %v47, 4294901760
    %1960 = vmatpush1.xpose.msra.mxu0 %v1959
    %1961 = vmatprep.subr.mxu0 0.0
    %1962 = vmatpush1.xpose.msra.mxu0 0.0
    %1963 = vmatprep.subr.mxu0 0.0
    %1964 = vmatpush1.xpose.msra.mxu0 0.0
    %1965 = vmatprep.subr.mxu0 0.0
    %1966 = vmatpush1.xpose.msra.mxu0 0.0
    %1967 = vmatprep.subr.mxu0 0.0
    %1968 = vmatpush1.xpose.msra.mxu0 0.0
    %1969 = vmatprep.subr.mxu0 0.0
    %1970 = vmatpush1.xpose.msra.mxu0 0.0
    %1971 = vmatprep.subr.mxu0 0.0
    %1972 = vmatpush1.xpose.msra.mxu0 0.0
    %1973 = vmatprep.subr.mxu0 0.0
    %1974 = vmatpush1.xpose.msra.mxu0 0.0
    %1975 = vmatprep.subr.mxu0 0.0
    %1976 = vmatpush1.xpose.msra.mxu0 0.0
    %1977 = vmatprep.subr.mxu0 0.0
    %1978 = vmatpush1.xpose.msra.mxu0 0.0
    %1979 = vmatprep.subr.mxu0 0.0
    %1980 = vmatpush1.xpose.msra.mxu0 0.0
    %1981 = vmatprep.subr.mxu0 0.0
    %1982 = vmatpush1.xpose.msra.mxu0 0.0
    %1983 = vmatprep.subr.mxu0 0.0
    %1984 = vmatpush1.xpose.msra.mxu0 0.0
    %1985 = vmatprep.subr.mxu0 0.0
    %1986 = vmatpush1.xpose.msra.mxu0 0.0
    %1987 = vmatprep.subr.mxu0 0.0
    %1988 = vmatpush1.xpose.msra.mxu0 0.0
    %1989 = vmatprep.subr.mxu0 0.0
    %1990 = vmatpush1.xpose.msra.mxu0 0.0
    %1991 = vmatprep.subr.mxu0 0.0
    %1992 = vmatpush1.xpose.msra.mxu0 0.0
    %1993 = vmatprep.subr.mxu0 0.0
    %1994 = vmatpush1.xpose.msra.mxu0 0.0
    %1995 = vmatprep.subr.mxu0 0.0
    %1996 = vmatpush1.xpose.msra.mxu0 0.0
    %1997 = vmatprep.subr.mxu0 0.0
    %1998 = vmatpush1.xpose.msra.mxu0 0.0
    %1999 = vmatprep.subr.mxu0 0.0
    %2000 = vmatpush1.xpose.msra.mxu0 0.0
    %2001 = vmatprep.subr.mxu0 0.0
    %2002 = vmatpush1.xpose.msra.mxu0 0.0
    %2003 = vmatprep.subr.mxu0 0.0
    %2004 = vmatpush1.xpose.msra.mxu0 0.0
    %2005 = vmatprep.subr.mxu0 0.0
    %2006 = vmatpush1.xpose.msra.mxu0 0.0
    %2007 = vmatprep.subr.mxu0 0.0
    %2008 = vmatpush1.xpose.msra.mxu0 0.0
    %2009 = vmatprep.subr.mxu0 0.0
    %2010 = vmatpush1.xpose.msra.mxu0 0.0
    %2011 = vmatprep.subr.mxu0 0.0
    %2012 = vmatpush1.xpose.msra.mxu0 0.0
    %2013 = vmatprep.subr.mxu0 0.0
    %2014 = vmatpush1.xpose.msra.mxu0 0.0
    %2015 = vmatprep.subr.mxu0 0.0
    %2016 = vmatpush1.xpose.msra.mxu0 0.0
    %2017 = vmatprep.subr.mxu0 0.0
    %2018 = vmatpush1.xpose.msra.mxu0 0.0
    %2019 = vmatprep.subr.mxu0 0.0
    %2020 = vmatpush1.xpose.msra.mxu0 0.0
    %2021 = vmatprep.subr.mxu0 0.0
    %2022 = vmatpush1.xpose.msra.mxu0 0.0
    %v2023 = vand.u32 %v1080, 4294901760
    %2024 = vmatprep.mubr.f32.mxu0 %v2023
    %v2025 = vand.u32 %v1079, 4294901760
    %2026 = vmatmul.mubr.f32.gmra.mrb[0].mxu0 %v2025
    %v2027 = vpop.f32.mrb[0].mxu0
    %v2028 = vadd.f32 %v1954, %v2027
    %v2029 = vpop.f32.mrb[0].mxu0
    %2030 = vdwg.mxu0
    %vm2031 = vcmask 24576
    %2032 = vst.msk [vmem:[#allocation8] sm:$0x1] %vm2031, %v1553
    %2033 = vst.msk [vmem:[#allocation8 + $0x1] sm:$0x1] %vm2031, %v2028
    // Predicated region
    $region22: #{tpu_custom_call.1} parent=1 // pred_check
      _
    $region23: #{tpu_custom_call.1} parent=1 // pred_check_branch
      %2035 = sbr.rel (0) target = $region25
    $region24: #{tpu_custom_call.1} parent=1 // pred_region
      %s2037 = ssub.s32 64, 64
      %2038 = vsyncadd [#allocation4], %s2037
      %s2039 = sshll.u32 [#allocation7], 4
      %s2040 = int_to_ptr.vmem [resolvable:$true] %s2039
      %2045 = dma.vmem_to_hbm [thread:$0]  %s2040, 64, %s3, [#allocation4], 32, 32, 2
    $region25: #{tpu_custom_call.1} parent=1 // pred_fallthru
      _
    // Predicated region
    $region26: #{tpu_custom_call.1} parent=1 // pred_check
      _
    $region27: #{tpu_custom_call.1} parent=1 // pred_check_branch
      %2047 = sbr.rel (0) target = $region29
    $region28: #{tpu_custom_call.1} parent=1 // pred_region
      %s2049 = ssub.s32 32, 32
      %2050 = vsyncadd [#allocation9], %s2049
      %s2051 = sshll.u32 [#allocation8], 4
      %s2052 = int_to_ptr.vmem [resolvable:$true] %s2051
      %2057 = dma.vmem_to_hbm [thread:$0]  %s2052, 32, %s4, [#allocation9], 16, 16, 1
    $region29: #{tpu_custom_call.1} parent=1 // pred_fallthru
      _
    // Predicated region
    $region30: #{tpu_custom_call.1} parent=1 // pred_check
      _
    $region31: #{tpu_custom_call.1} parent=1 // pred_check_branch
      %2059 = sbr.rel (0) target = $region33
    $region32: #{tpu_custom_call.1} parent=1 // pred_region
      %2060 = dma.done [#allocation4], 64
    $region33: #{tpu_custom_call.1} parent=1 // pred_fallthru
      _
    // Predicated region
    $region34: #{tpu_custom_call.1} parent=1 // pred_check
      _
    $region35: #{tpu_custom_call.1} parent=1 // pred_check_branch
      %2062 = sbr.rel (0) target = $region37
    $region36: #{tpu_custom_call.1} parent=1 // pred_region
      %2063 = dma.done [#allocation9], 32
    $region37: #{tpu_custom_call.1} parent=1 // pred_fallthru
      _
    %2064 = vsyncpa [#allocation3], 1
    %2065 = vsyncpa [#allocation6], 1
    %2066 = vsyncpa [#allocation4], 1
    %2067 = vsyncpa [#allocation9], 1

</llo_original>
